<compile_context>
chip_gen: v7x
topology: tpu7x:2x2x1
jax: 0.10.0
libtpu: 0.0.40
codegen_flags: <defaults>
</compile_context>

<pallas_src>
import functools

import jax
import jax.numpy as jnp
from jax.experimental import pallas as pl
from jax.experimental.pallas import tpu as pltpu


def combined_added_kernel(
    # activations (batch tile)
    src_ref, canv_ref,
    # fused mov/cat first layer: [wm1s | wc1] (bf16), [wm1c | 0] (bf16), [bm1 | bc1]
    w_in_src_ref, w_in_canv_ref, b_in_ref,
    # folded (mov/cat second layers @ e_l1): (2*dense, dense)
    w_fold_ref, b_fold_ref,
    # e_l2
    w2_ref, b2_ref,
    # fused e_l3 | e_l4
    w_head_ref, b_head_ref,
    # single fused output slab: [softmax(e_l3) | sigmoid(e_l4)]
    out_ref,
    *, moves_out,
):
    f32 = jnp.float32
    bf16 = jnp.bfloat16

    src = src_ref[...].astype(bf16)
    canv = canv_ref[...].astype(bf16)

    # ---- fused first layers of mov(src, canv) and cat(src): 2 big K=1024 matmuls ----
    h = (jnp.dot(src, w_in_src_ref[...], preferred_element_type=f32)
         + jnp.dot(canv, w_in_canv_ref[...], preferred_element_type=f32)
         + b_in_ref[...])
    h = jnp.maximum(h, 0.0)                     # (TB, 2*dense) = [h_mov | h_cat]

    # ---- folded (block-diagonal second layer @ e_l1) -> dropout(identity) -> relu ----
    x = jnp.dot(h, w_fold_ref[...], preferred_element_type=f32) + b_fold_ref[...]
    x = jnp.maximum(x, 0.0)

    # ---- e_l2 -> (dropout=identity) -> relu ----
    x_m = jnp.dot(x, w2_ref[...], preferred_element_type=f32) + b2_ref[...]
    x_m = jnp.maximum(x_m, 0.0)

    # ---- fused heads: z[:, :mo] is e_l3 logits, z[:, mo:] is e_l4 logits ----
    z = jnp.dot(x_m, w_head_ref[...], preferred_element_type=f32) + b_head_ref[...]

    # masked softmax on the first `moves_out` lanes, sigmoid on the rest
    lane = jax.lax.broadcasted_iota(jnp.int32, z.shape, 1)
    is_mov = lane < moves_out
    z_mov = jnp.where(is_mov, z, jnp.float32(-jnp.inf))
    z_max = jnp.max(z_mov, axis=-1, keepdims=True)
    # mask the exp argument too (keeps sigmoid lanes from producing transient inf)
    e = jnp.where(is_mov, jnp.exp(jnp.where(is_mov, z - z_max, 0.0)), 0.0)
    denom = jnp.sum(e, axis=-1, keepdims=True)
    probs = e / denom
    sig = jax.nn.sigmoid(z)
    out_ref[...] = jnp.where(is_mov, probs, sig).astype(out_ref.dtype)


def pack_params(raw, src_dim, dense, moves_out, out_features):
    """Fuse raw (PyTorch-style) weights into the kernel's packed layout."""
    (wm1, bm1, wm2, bm2,            # mov stand-in
     wc1, bc1, wc2, bc2,            # cat stand-in
     w1, b1, w2, b2, w3, b3, w4, b4) = raw

    wm1s, wm1c = wm1[:src_dim], wm1[src_dim:]

    # fused first layer: src path gets [mov | cat] columns, canv path is zero-padded
    # on the cat half.  Big weights stored bf16 (halved DMA); biases stay f32.
    w_in_src = jnp.concatenate([wm1s, wc1], axis=1).astype(jnp.bfloat16)
    w_in_canv = jnp.concatenate([wm1c, jnp.zeros_like(wm1c)], axis=1).astype(jnp.bfloat16)
    b_in = jnp.concatenate([bm1, bc1], axis=1)

    # Algebraic fold of (block-diagonal second layer) @ e_l1 -- no nonlinearity in
    # between (dropout is identity in eval), so this is exact in f32:
    #   concat([x1, x2]) @ w1 == h_mov @ (wm2 @ w1[:mo]) + h_cat @ (wc2 @ w1[mo:])
    w1_top = w1[:moves_out]          # (mo, dense)
    w1_bot = w1[moves_out:]          # (of, dense)
    w_fold = jnp.concatenate([wm2 @ w1_top, wc2 @ w1_bot], axis=0)   # (2*dense, dense)
    b_fold = bm2 @ w1_top + bc2 @ w1_bot + b1                        # (1, dense)

    # fused output heads (e_l3 | e_l4)
    w_head = jnp.concatenate([w3, w4], axis=1)
    b_head = jnp.concatenate([b3, b4], axis=1)

    return (w_in_src, w_in_canv, b_in, w_fold, b_fold,
            w2, b2, w_head, b_head)


def combined_added_forward(src, canv, packed_params, *, moves_out, out_features,
                           batch_block=512):
    """src, canv: (B, C, H, W) float32 NCHW.  Returns (softmax probs, sigmoid outs)."""
    B = src.shape[0]
    src_flat = src.reshape(B, -1).astype(jnp.float32)
    canv_flat = canv.reshape(B, -1).astype(jnp.float32)
    comb = moves_out + out_features

    # Batch tile selection:
    #   * single block if B is small (block == full array, so no (8,128) constraint),
    #   * otherwise cap at batch_block (512 fits v5e's 16 MiB scoped-VMEM default with
    #     double-buffered f32 src+canv blocks), and
    #   * for large B keep grid >= 2 (cap at ceil(B/2) rounded to a multiple of 8) so
    #     dimension_semantics=("parallel",) can shard across v7x's 2 TensorCores.
    if B <= batch_block:
        tb = B
        if B > 16 and B % 8 == 0:
            half = ((B // 2 + 7) // 8) * 8
            if half >= 8 and B % half == 0:
                tb = half          # exact split -> 2 grid steps, no ragged tile
    else:
        tb = batch_block
    grid = (pl.cdiv(B, tb),)

    def batch_spec(feat):
        return pl.BlockSpec((tb, feat), lambda i: (i, 0))

    def const_spec(arr):
        return pl.BlockSpec(arr.shape, lambda i: (0, 0))   # resident across grid steps

    in_specs = ([batch_spec(src_flat.shape[1]), batch_spec(canv_flat.shape[1])]
                + [const_spec(p) for p in packed_params])
    out_spec = pl.BlockSpec((tb, comb), lambda i: (i, 0))

    kernel = functools.partial(combined_added_kernel, moves_out=moves_out)
    fused = pl.pallas_call(
        kernel,
        out_shape=jax.ShapeDtypeStruct((B, comb), jnp.float32),
        grid=grid,
        in_specs=in_specs,
        out_specs=out_spec,
        compiler_params=pltpu.CompilerParams(dimension_semantics=("parallel",)),
    )(src_flat, canv_flat, *packed_params)

    # Split the lane-dense fused output outside the kernel.
    return fused[:, :moves_out], fused[:, moves_out:]


def init_params(key, src_dim, canv_dim, dense_size, moves_out_size, out_features):
    """Deterministic synthetic parameters, PyTorch-Linear style: (in, out) + (1, out)."""
    def lin(k, n_in, n_out):
        kw, kb = jax.random.split(k)
        bound = 1.0 / jnp.sqrt(jnp.float32(n_in))
        w = jax.random.uniform(kw, (n_in, n_out), jnp.float32, -bound, bound)
        b = jax.random.uniform(kb, (1, n_out), jnp.float32, -bound, bound)
        return w, b

    keys = jax.random.split(key, 8)
    combined = moves_out_size + out_features

    # mov stand-in: Linear(src+canv -> dense) -> relu -> Linear(dense -> moves_out)
    wm1, bm1 = lin(keys[0], src_dim + canv_dim, dense_size)
    wm2, bm2 = lin(keys[1], dense_size, moves_out_size)
    # cat stand-in: Linear(src -> dense) -> relu -> Linear(dense -> out_features)
    wc1, bc1 = lin(keys[2], src_dim, dense_size)
    wc2, bc2 = lin(keys[3], dense_size, out_features)
    # head: e_l1, e_l2, e_l3, e_l4
    w1, b1 = lin(keys[4], combined, dense_size)
    w2, b2 = lin(keys[5], dense_size, dense_size)
    w3, b3 = lin(keys[6], dense_size, moves_out_size)
    w4, b4 = lin(keys[7], dense_size, out_features)

    return (wm1, bm1, wm2, bm2, wc1, bc1, wc2, bc2,
            w1, b1, w2, b2, w3, b3, w4, b4)


if __name__ == "__main__":
    # Small shapes consistent with the module's forward (NCHW image inputs).
    B, C, H, W = 2, 4, 16, 16
    dense_size = 32
    moves_out_size = 8
    out_features = 4

    key = jax.random.PRNGKey(0)
    k_src, k_canv, k_params = jax.random.split(key, 3)
    src = jax.random.normal(k_src, (B, C, H, W), jnp.float32)
    canv = jax.random.normal(k_canv, (B, C, H, W), jnp.float32)

    src_dim = canv_dim = C * H * W
    raw = init_params(k_params, src_dim, canv_dim,
                      dense_size, moves_out_size, out_features)
    packed = pack_params(raw, src_dim, dense_size, moves_out_size, out_features)

    fwd = jax.jit(functools.partial(combined_added_forward,
                                    moves_out=moves_out_size,
                                    out_features=out_features))
    out1, out2 = fwd(src, canv, packed)
    jax.block_until_ready((out1, out2))

    assert out1.shape == (B, moves_out_size)
    assert out2.shape == (B, out_features)
    # softmax rows sum to 1; sigmoid in [0, 1]
    assert jnp.allclose(jnp.sum(out1, axis=1), 1.0, atol=1e-5)
    assert bool(jnp.all((out2 >= 0.0) & (out2 <= 1.0)))
    print("KERNEL_OK")
</pallas_src>

<mosaic_0001>
module attributes {stable_mosaic.version = 11 : i64} {
  func.func @combined_added_kernel(%arg0: i32, %arg1: memref<2x1024xf32, #tpu.memory_space<vmem>>, %arg2: memref<2x1024xf32, #tpu.memory_space<vmem>>, %arg3: memref<1024x64xbf16, #tpu.memory_space<vmem>>, %arg4: memref<1024x64xbf16, #tpu.memory_space<vmem>>, %arg5: memref<1x64xf32, #tpu.memory_space<vmem>>, %arg6: memref<64x32xf32, #tpu.memory_space<vmem>>, %arg7: memref<1x32xf32, #tpu.memory_space<vmem>>, %arg8: memref<32x32xf32, #tpu.memory_space<vmem>>, %arg9: memref<1x32xf32, #tpu.memory_space<vmem>>, %arg10: memref<32x12xf32, #tpu.memory_space<vmem>>, %arg11: memref<1x12xf32, #tpu.memory_space<vmem>>, %arg12: memref<2x12xf32, #tpu.memory_space<vmem>>) attributes {dimension_semantics = [#tpu.dimension_semantics<parallel>], iteration_bounds = array<i64: 1>, scalar_prefetch = 0 : i64, scratch_operands = 0 : i64, tpu.core_type = #tpu.core_type<tc>, window_params = [{transform_indices = @transform_0, window_bounds = array<i64: 2, 1024>}, {transform_indices = @transform_1, window_bounds = array<i64: 2, 1024>}, {pipeline_mode = #tpu.pipeline_mode<synchronous>, transform_indices = @transform_2, window_bounds = array<i64: 1024, 64>}, {pipeline_mode = #tpu.pipeline_mode<synchronous>, transform_indices = @transform_3, window_bounds = array<i64: 1024, 64>}, {pipeline_mode = #tpu.pipeline_mode<synchronous>, transform_indices = @transform_4, window_bounds = array<i64: 1, 64>}, {pipeline_mode = #tpu.pipeline_mode<synchronous>, transform_indices = @transform_5, window_bounds = array<i64: 64, 32>}, {pipeline_mode = #tpu.pipeline_mode<synchronous>, transform_indices = @transform_6, window_bounds = array<i64: 1, 32>}, {pipeline_mode = #tpu.pipeline_mode<synchronous>, transform_indices = @transform_7, window_bounds = array<i64: 32, 32>}, {pipeline_mode = #tpu.pipeline_mode<synchronous>, transform_indices = @transform_8, window_bounds = array<i64: 1, 32>}, {pipeline_mode = #tpu.pipeline_mode<synchronous>, transform_indices = @transform_9, window_bounds = array<i64: 32, 12>}, {pipeline_mode = #tpu.pipeline_mode<synchronous>, transform_indices = @transform_10, window_bounds = array<i64: 1, 12>}, {transform_indices = @transform_11, window_bounds = array<i64: 2, 12>}]} {
    %c0 = arith.constant 0 : index
    %c0_0 = arith.constant 0 : index
    %0 = vector.load %arg1[%c0, %c0_0] : memref<2x1024xf32, #tpu.memory_space<vmem>>, vector<2x1024xf32>
    %1 = arith.truncf %0 : vector<2x1024xf32> to vector<2x1024xbf16>
    %c0_1 = arith.constant 0 : index
    %c0_2 = arith.constant 0 : index
    %2 = vector.load %arg2[%c0_1, %c0_2] : memref<2x1024xf32, #tpu.memory_space<vmem>>, vector<2x1024xf32>
    %3 = arith.truncf %2 : vector<2x1024xf32> to vector<2x1024xbf16>
    %c0_3 = arith.constant 0 : index
    %c0_4 = arith.constant 0 : index
    %4 = vector.load %arg3[%c0_3, %c0_4] : memref<1024x64xbf16, #tpu.memory_space<vmem>>, vector<1024x64xbf16>
    %cst = arith.constant dense<0.000000e+00> : vector<2x64xf32>
    %5 = tpu.matmul %1, %4, %cst {dimension_numbers = #tpu.dot_dimension_numbers<[1], [0], [0], [1], [0, 0, 1, 1], [], []>} : vector<2x1024xbf16>, vector<1024x64xbf16>, vector<2x64xf32> -> vector<2x64xf32>
    %c0_5 = arith.constant 0 : index
    %c0_6 = arith.constant 0 : index
    %6 = vector.load %arg4[%c0_5, %c0_6] : memref<1024x64xbf16, #tpu.memory_space<vmem>>, vector<1024x64xbf16>
    %cst_7 = arith.constant dense<0.000000e+00> : vector<2x64xf32>
    %7 = tpu.matmul %3, %6, %cst_7 {dimension_numbers = #tpu.dot_dimension_numbers<[1], [0], [0], [1], [0, 0, 1, 1], [], []>} : vector<2x1024xbf16>, vector<1024x64xbf16>, vector<2x64xf32> -> vector<2x64xf32>
    %8 = arith.addf %5, %7 : vector<2x64xf32>
    %c0_8 = arith.constant 0 : index
    %c0_9 = arith.constant 0 : index
    %9 = vector.load %arg5[%c0_8, %c0_9] : memref<1x64xf32, #tpu.memory_space<vmem>>, vector<1x64xf32>
    %10 = vector.broadcast %9 : vector<1x64xf32> to vector<2x64xf32>
    %11 = arith.addf %8, %10 : vector<2x64xf32>
    %cst_10 = arith.constant 0.000000e+00 : f32
    %12 = vector.broadcast %cst_10 : f32 to vector<2x64xf32>
    %13 = arith.maximumf %11, %12 : vector<2x64xf32>
    %c0_11 = arith.constant 0 : index
    %c0_12 = arith.constant 0 : index
    %14 = vector.load %arg6[%c0_11, %c0_12] : memref<64x32xf32, #tpu.memory_space<vmem>>, vector<64x32xf32>
    %cst_13 = arith.constant dense<0.000000e+00> : vector<2x32xf32>
    %15 = tpu.matmul %13, %14, %cst_13 {dimension_numbers = #tpu.dot_dimension_numbers<[1], [0], [0], [1], [0, 0, 1, 1], [], []>} : vector<2x64xf32>, vector<64x32xf32>, vector<2x32xf32> -> vector<2x32xf32>
    %c0_14 = arith.constant 0 : index
    %c0_15 = arith.constant 0 : index
    %16 = vector.load %arg7[%c0_14, %c0_15] : memref<1x32xf32, #tpu.memory_space<vmem>>, vector<1x32xf32>
    %17 = vector.broadcast %16 : vector<1x32xf32> to vector<2x32xf32>
    %18 = arith.addf %15, %17 : vector<2x32xf32>
    %cst_16 = arith.constant 0.000000e+00 : f32
    %19 = vector.broadcast %cst_16 : f32 to vector<2x32xf32>
    %20 = arith.maximumf %18, %19 : vector<2x32xf32>
    %c0_17 = arith.constant 0 : index
    %c0_18 = arith.constant 0 : index
    %21 = vector.load %arg8[%c0_17, %c0_18] : memref<32x32xf32, #tpu.memory_space<vmem>>, vector<32x32xf32>
    %cst_19 = arith.constant dense<0.000000e+00> : vector<2x32xf32>
    %22 = tpu.matmul %20, %21, %cst_19 {dimension_numbers = #tpu.dot_dimension_numbers<[1], [0], [0], [1], [0, 0, 1, 1], [], []>} : vector<2x32xf32>, vector<32x32xf32>, vector<2x32xf32> -> vector<2x32xf32>
    %c0_20 = arith.constant 0 : index
    %c0_21 = arith.constant 0 : index
    %23 = vector.load %arg9[%c0_20, %c0_21] : memref<1x32xf32, #tpu.memory_space<vmem>>, vector<1x32xf32>
    %24 = vector.broadcast %23 : vector<1x32xf32> to vector<2x32xf32>
    %25 = arith.addf %22, %24 : vector<2x32xf32>
    %cst_22 = arith.constant 0.000000e+00 : f32
    %26 = vector.broadcast %cst_22 : f32 to vector<2x32xf32>
    %27 = arith.maximumf %25, %26 : vector<2x32xf32>
    %c0_23 = arith.constant 0 : index
    %c0_24 = arith.constant 0 : index
    %28 = vector.load %arg10[%c0_23, %c0_24] : memref<32x12xf32, #tpu.memory_space<vmem>>, vector<32x12xf32>
    %cst_25 = arith.constant dense<0.000000e+00> : vector<2x12xf32>
    %29 = tpu.matmul %27, %28, %cst_25 {dimension_numbers = #tpu.dot_dimension_numbers<[1], [0], [0], [1], [0, 0, 1, 1], [], []>} : vector<2x32xf32>, vector<32x12xf32>, vector<2x12xf32> -> vector<2x12xf32>
    %c0_26 = arith.constant 0 : index
    %c0_27 = arith.constant 0 : index
    %30 = vector.load %arg11[%c0_26, %c0_27] : memref<1x12xf32, #tpu.memory_space<vmem>>, vector<1x12xf32>
    %31 = vector.broadcast %30 : vector<1x12xf32> to vector<2x12xf32>
    %32 = arith.addf %29, %31 : vector<2x12xf32>
    %33 = tpu.iota {dimensions = array<i32: 1>} : vector<2x12xi32>
    %c8_i32 = arith.constant 8 : i32
    %34 = vector.broadcast %c8_i32 : i32 to vector<2x12xi32>
    %35 = arith.cmpi slt, %33, %34 : vector<2x12xi32>
    %cst_28 = arith.constant 0xFF800000 : f32
    %36 = vector.broadcast %cst_28 : f32 to vector<2x12xf32>
    %37 = arith.select %35, %32, %36 : vector<2x12xi1>, vector<2x12xf32>
    %cst_29 = arith.constant dense<0xFF800000> : vector<2xf32>
    %38 = vector.multi_reduction <maximumf>, %37, %cst_29 [1] : vector<2x12xf32> to vector<2xf32>
    %39 = vector.shape_cast %38 : vector<2xf32> to vector<2x1xf32>
    %40 = vector.broadcast %39 : vector<2x1xf32> to vector<2x12xf32>
    %41 = arith.subf %32, %40 : vector<2x12xf32>
    %cst_30 = arith.constant 0.000000e+00 : f32
    %42 = vector.broadcast %cst_30 : f32 to vector<2x12xf32>
    %43 = arith.select %35, %41, %42 : vector<2x12xi1>, vector<2x12xf32>
    %44 = math.exp %43 : vector<2x12xf32>
    %cst_31 = arith.constant 0.000000e+00 : f32
    %45 = vector.broadcast %cst_31 : f32 to vector<2x12xf32>
    %46 = arith.select %35, %44, %45 : vector<2x12xi1>, vector<2x12xf32>
    %cst_32 = arith.constant dense<0.000000e+00> : vector<2xf32>
    %47 = vector.multi_reduction <add>, %46, %cst_32 [1] : vector<2x12xf32> to vector<2xf32>
    %48 = vector.shape_cast %47 : vector<2xf32> to vector<2x1xf32>
    %49 = vector.broadcast %48 : vector<2x1xf32> to vector<2x12xf32>
    %50 = arith.divf %46, %49 : vector<2x12xf32>
    %51 = arith.negf %32 : vector<2x12xf32>
    %52 = math.exp %51 : vector<2x12xf32>
    %cst_33 = arith.constant 1.000000e+00 : f32
    %53 = vector.broadcast %cst_33 : f32 to vector<2x12xf32>
    %54 = arith.addf %53, %52 : vector<2x12xf32>
    %55 = arith.divf %53, %54 : vector<2x12xf32>
    %56 = arith.select %35, %50, %55 : vector<2x12xi1>, vector<2x12xf32>
    %c0_34 = arith.constant 0 : index
    %c0_35 = arith.constant 0 : index
    %57 = vector.load %arg12[%c0_34, %c0_35] : memref<2x12xf32, #tpu.memory_space<vmem>>, vector<2x12xf32>
    tpu.vector_store %arg12[%c0_34, %c0_35], %56 {strides = array<i32>} : memref<2x12xf32, #tpu.memory_space<vmem>>, vector<2x12xf32>,
    return
  }
  func.func @transform_0(%arg0: i32) -> (i32, i32) {
    %c0_i32 = arith.constant 0 : i32
    %c0_i32_0 = arith.constant 0 : i32
    return %arg0, %c0_i32 : i32, i32
  }
  func.func @transform_1(%arg0: i32) -> (i32, i32) {
    %c0_i32 = arith.constant 0 : i32
    %c0_i32_0 = arith.constant 0 : i32
    return %arg0, %c0_i32 : i32, i32
  }
  func.func @transform_2(%arg0: i32) -> (i32, i32) {
    %c0_i32 = arith.constant 0 : i32
    %c0_i32_0 = arith.constant 0 : i32
    %c0_i32_1 = arith.constant 0 : i32
    return %c0_i32, %c0_i32_0 : i32, i32
  }
  func.func @transform_3(%arg0: i32) -> (i32, i32) {
    %c0_i32 = arith.constant 0 : i32
    %c0_i32_0 = arith.constant 0 : i32
    %c0_i32_1 = arith.constant 0 : i32
    return %c0_i32, %c0_i32_0 : i32, i32
  }
  func.func @transform_4(%arg0: i32) -> (i32, i32) {
    %c0_i32 = arith.constant 0 : i32
    %c0_i32_0 = arith.constant 0 : i32
    %c0_i32_1 = arith.constant 0 : i32
    return %c0_i32, %c0_i32_0 : i32, i32
  }
  func.func @transform_5(%arg0: i32) -> (i32, i32) {
    %c0_i32 = arith.constant 0 : i32
    %c0_i32_0 = arith.constant 0 : i32
    %c0_i32_1 = arith.constant 0 : i32
    return %c0_i32, %c0_i32_0 : i32, i32
  }
  func.func @transform_6(%arg0: i32) -> (i32, i32) {
    %c0_i32 = arith.constant 0 : i32
    %c0_i32_0 = arith.constant 0 : i32
    %c0_i32_1 = arith.constant 0 : i32
    return %c0_i32, %c0_i32_0 : i32, i32
  }
  func.func @transform_7(%arg0: i32) -> (i32, i32) {
    %c0_i32 = arith.constant 0 : i32
    %c0_i32_0 = arith.constant 0 : i32
    %c0_i32_1 = arith.constant 0 : i32
    return %c0_i32, %c0_i32_0 : i32, i32
  }
  func.func @transform_8(%arg0: i32) -> (i32, i32) {
    %c0_i32 = arith.constant 0 : i32
    %c0_i32_0 = arith.constant 0 : i32
    %c0_i32_1 = arith.constant 0 : i32
    return %c0_i32, %c0_i32_0 : i32, i32
  }
  func.func @transform_9(%arg0: i32) -> (i32, i32) {
    %c0_i32 = arith.constant 0 : i32
    %c0_i32_0 = arith.constant 0 : i32
    %c0_i32_1 = arith.constant 0 : i32
    return %c0_i32, %c0_i32_0 : i32, i32
  }
  func.func @transform_10(%arg0: i32) -> (i32, i32) {
    %c0_i32 = arith.constant 0 : i32
    %c0_i32_0 = arith.constant 0 : i32
    %c0_i32_1 = arith.constant 0 : i32
    return %c0_i32, %c0_i32_0 : i32, i32
  }
  func.func @transform_11(%arg0: i32) -> (i32, i32) {
    %c0_i32 = arith.constant 0 : i32
    %c0_i32_0 = arith.constant 0 : i32
    return %arg0, %c0_i32 : i32, i32
  }
}

</mosaic_0001>

<llo_original>
// kernel: combined_added_forward.1
$region0: #{combined_added_forward.1}
  #allocation0 [shape = 'u32[]', space=smem, size = 0x4, offset = 0x4, fixed_abs, tag = 'smem constant byte address 0x4 - core index']
  #allocation1 [shape = 'u32[144,128]{1,0:T(1,128)}', space=vmem, size = 0x12000, scoped, tag = 'internal scratch']
  %s0 = inlined_call_operand.vmem [shape: f32[2,1024], index: 0, kind: input, shape index: {}]
  %s1 = inlined_call_operand.vmem [shape: f32[2,1024], index: 1, kind: input, shape index: {}]
  %s2 = inlined_call_operand.vmem [shape: bf16[1024,64], index: 2, kind: input, shape index: {}]
  %s3 = inlined_call_operand.vmem [shape: bf16[1024,64], index: 3, kind: input, shape index: {}]
  %s4 = inlined_call_operand.vmem [shape: f32[1,64], index: 4, kind: input, shape index: {}]
  %s5 = inlined_call_operand.vmem [shape: f32[64,32], index: 5, kind: input, shape index: {}]
  %s6 = inlined_call_operand.vmem [shape: f32[1,32], index: 6, kind: input, shape index: {}]
  %s7 = inlined_call_operand.vmem [shape: f32[32,32], index: 7, kind: input, shape index: {}]
  %s8 = inlined_call_operand.vmem [shape: f32[1,32], index: 8, kind: input, shape index: {}]
  %s9 = inlined_call_operand.vmem [shape: f32[32,12], index: 9, kind: input, shape index: {}]
  %s10 = inlined_call_operand.vmem [shape: f32[1,12], index: 10, kind: input, shape index: {}]
  %s11 = inlined_call_operand.vmem [shape: f32[2,12], index: 11, kind: output, shape index: {}]
  %s12 = sld [smem:[#allocation0]]
  $region54: #{combined_added_forward.1} parent=0
    _
  %s14 = ssub.s32 1, %s12
  %s15 = scalar_select 0, %s14, %s12
  // Predicated region
  $region2: #{combined_added_forward.1} parent=0 // pred_check
    _
  $region3: #{combined_added_forward.1} parent=0 // pred_check_branch
    %17 = sbr.rel (0) target = $region5
  $region4: #{combined_added_forward.1} parent=0 // pred_region
    _
  $region5: #{combined_added_forward.1} parent=0 // pred_fallthru
    _
  // Predicated region
  $region6: #{combined_added_forward.1} parent=0 // pred_check
    _
  $region7: #{combined_added_forward.1} parent=0 // pred_check_branch
    %19 = sbr.rel (0) target = $region9
  $region8: #{combined_added_forward.1} parent=0 // pred_region
    _
  $region9: #{combined_added_forward.1} parent=0 // pred_fallthru
    _
  // Predicated region
  $region10: #{combined_added_forward.1} parent=0 // pred_check
    _
  $region11: #{combined_added_forward.1} parent=0 // pred_check_branch
    %21 = sbr.rel (0) target = $region13
  $region12: #{combined_added_forward.1} parent=0 // pred_region
    _
  $region13: #{combined_added_forward.1} parent=0 // pred_fallthru
    _
  // Predicated region
  $region14: #{combined_added_forward.1} parent=0 // pred_check
    _
  $region15: #{combined_added_forward.1} parent=0 // pred_check_branch
    %23 = sbr.rel (0) target = $region17
  $region16: #{combined_added_forward.1} parent=0 // pred_region
    _
  $region17: #{combined_added_forward.1} parent=0 // pred_fallthru
    _
  // Predicated region
  $region18: #{combined_added_forward.1} parent=0 // pred_check
    _
  $region19: #{combined_added_forward.1} parent=0 // pred_check_branch
    %25 = sbr.rel (0) target = $region21
  $region20: #{combined_added_forward.1} parent=0 // pred_region
    _
  $region21: #{combined_added_forward.1} parent=0 // pred_fallthru
    _
  // Predicated region
  $region22: #{combined_added_forward.1} parent=0 // pred_check
    _
  $region23: #{combined_added_forward.1} parent=0 // pred_check_branch
    %27 = sbr.rel (0) target = $region25
  $region24: #{combined_added_forward.1} parent=0 // pred_region
    _
  $region25: #{combined_added_forward.1} parent=0 // pred_fallthru
    _
  // Predicated region
  $region26: #{combined_added_forward.1} parent=0 // pred_check
    _
  $region27: #{combined_added_forward.1} parent=0 // pred_check_branch
    %29 = sbr.rel (0) target = $region29
  $region28: #{combined_added_forward.1} parent=0 // pred_region
    _
  $region29: #{combined_added_forward.1} parent=0 // pred_fallthru
    _
  // Predicated region
  $region30: #{combined_added_forward.1} parent=0 // pred_check
    _
  $region31: #{combined_added_forward.1} parent=0 // pred_check_branch
    %31 = sbr.rel (0) target = $region33
  $region32: #{combined_added_forward.1} parent=0 // pred_region
    _
  $region33: #{combined_added_forward.1} parent=0 // pred_fallthru
    _
  // Predicated region
  $region34: #{combined_added_forward.1} parent=0 // pred_check
    _
  $region35: #{combined_added_forward.1} parent=0 // pred_check_branch
    %33 = sbr.rel (0) target = $region37
  $region36: #{combined_added_forward.1} parent=0 // pred_region
    _
  $region37: #{combined_added_forward.1} parent=0 // pred_fallthru
    _
  // Predicated region
  $region38: #{combined_added_forward.1} parent=0 // pred_check
    _
  $region39: #{combined_added_forward.1} parent=0 // pred_check_branch
    %35 = sbr.rel (0) target = $region41
  $region40: #{combined_added_forward.1} parent=0 // pred_region
    _
  $region41: #{combined_added_forward.1} parent=0 // pred_fallthru
    _
  // Predicated region
  $region42: #{combined_added_forward.1} parent=0 // pred_check
    _
  $region43: #{combined_added_forward.1} parent=0 // pred_check_branch
    %37 = sbr.rel (0) target = $region45
  $region44: #{combined_added_forward.1} parent=0 // pred_region
    _
  $region45: #{combined_added_forward.1} parent=0 // pred_fallthru
    _
  %v39 = vld [vmem:[%s0] sm:$0xff]
  %v40 = vld [vmem:[%s0 + $0x8] sm:$0xff]
  %v43 = vcombine.high %v39, %v39
  %v45 = vunpack.c.l.s4 1983009808
  %v46 = vunpack.c.0.s8 %v45
  %v47 = vlaneseq
  %v48 = vshrl.u32 %v47, 7
  %v49 = vsub.s32 %v46, %v48
  %v50 = vrot.slane %v39, %v49
  %v52 = vunpack.c.l.s4 1983009808
  %v53 = vunpack.c.0.s8 %v52
  %v54 = vlaneseq
  %v55 = vshrl.u32 %v54, 7
  %v56 = vsub.s32 %v53, %v55
  %v57 = vrot.slane %v43, %v56
  %v58 = vcombine.high %v50, %v50
  %v59 = vcombine.high %v57, %v57
  %v60 = vcombine.high %v40, %v40
  %v62 = vunpack.c.l.s4 1983009808
  %v63 = vunpack.c.0.s8 %v62
  %v64 = vlaneseq
  %v65 = vshrl.u32 %v64, 7
  %v66 = vsub.s32 %v63, %v65
  %v67 = vrot.slane %v40, %v66
  %v69 = vunpack.c.l.s4 1983009808
  %v70 = vunpack.c.0.s8 %v69
  %v71 = vlaneseq
  %v72 = vshrl.u32 %v71, 7
  %v73 = vsub.s32 %v70, %v72
  %v74 = vrot.slane %v60, %v73
  %v75 = vcombine.high %v67, %v67
  %v76 = vcombine.high %v74, %v74
  %v85 = vpack.c.bf16 %v50, %v50
  %v86 = vpack.c.bf16 %v58, %v58
  %v87 = vpack.c.bf16 %v57, %v57
  %v88 = vpack.c.bf16 %v59, %v59
  %v89 = vpack.c.bf16 %v67, %v67
  %v90 = vpack.c.bf16 %v75, %v75
  %v91 = vpack.c.bf16 %v74, %v74
  %v92 = vpack.c.bf16 %v76, %v76
  %v93 = vld [vmem:[%s1] sm:$0xff]
  %v94 = vld [vmem:[%s1 + $0x8] sm:$0xff]
  %v97 = vcombine.high %v93, %v93
  %v99 = vunpack.c.l.s4 1983009808
  %v100 = vunpack.c.0.s8 %v99
  %v101 = vlaneseq
  %v102 = vshrl.u32 %v101, 7
  %v103 = vsub.s32 %v100, %v102
  %v104 = vrot.slane %v93, %v103
  %v106 = vunpack.c.l.s4 1983009808
  %v107 = vunpack.c.0.s8 %v106
  %v108 = vlaneseq
  %v109 = vshrl.u32 %v108, 7
  %v110 = vsub.s32 %v107, %v109
  %v111 = vrot.slane %v97, %v110
  %v112 = vcombine.high %v104, %v104
  %v113 = vcombine.high %v111, %v111
  %v114 = vcombine.high %v94, %v94
  %v116 = vunpack.c.l.s4 1983009808
  %v117 = vunpack.c.0.s8 %v116
  %v118 = vlaneseq
  %v119 = vshrl.u32 %v118, 7
  %v120 = vsub.s32 %v117, %v119
  %v121 = vrot.slane %v94, %v120
  %v123 = vunpack.c.l.s4 1983009808
  %v124 = vunpack.c.0.s8 %v123
  %v125 = vlaneseq
  %v126 = vshrl.u32 %v125, 7
  %v127 = vsub.s32 %v124, %v126
  %v128 = vrot.slane %v114, %v127
  %v129 = vcombine.high %v121, %v121
  %v130 = vcombine.high %v128, %v128
  %v139 = vpack.c.bf16 %v104, %v104
  %v140 = vpack.c.bf16 %v112, %v112
  %v141 = vpack.c.bf16 %v111, %v111
  %v142 = vpack.c.bf16 %v113, %v113
  %v143 = vpack.c.bf16 %v121, %v121
  %v144 = vpack.c.bf16 %v129, %v129
  %v145 = vpack.c.bf16 %v128, %v128
  %v146 = vpack.c.bf16 %v130, %v130
  %v147 = vld [vmem:[%s2] sm:$0xf]
  %v148 = vld [vmem:[%s2 + $0x4] sm:$0xf]
  %v149 = vld [vmem:[%s2 + $0x8] sm:$0xf]
  %v150 = vld [vmem:[%s2 + $0xc] sm:$0xf]
  %v151 = vld [vmem:[%s2 + $0x10] sm:$0xf]
  %v152 = vld [vmem:[%s2 + $0x14] sm:$0xf]
  %v153 = vld [vmem:[%s2 + $0x18] sm:$0xf]
  %v154 = vld [vmem:[%s2 + $0x1c] sm:$0xf]
  %v155 = vld [vmem:[%s2 + $0x20] sm:$0xf]
  %v156 = vld [vmem:[%s2 + $0x24] sm:$0xf]
  %v157 = vld [vmem:[%s2 + $0x28] sm:$0xf]
  %v158 = vld [vmem:[%s2 + $0x2c] sm:$0xf]
  %v159 = vld [vmem:[%s2 + $0x30] sm:$0xf]
  %v160 = vld [vmem:[%s2 + $0x34] sm:$0xf]
  %v161 = vld [vmem:[%s2 + $0x38] sm:$0xf]
  %v162 = vld [vmem:[%s2 + $0x3c] sm:$0xf]
  %v163 = vld [vmem:[%s2 + $0x40] sm:$0xf]
  %v164 = vld [vmem:[%s2 + $0x44] sm:$0xf]
  %v165 = vld [vmem:[%s2 + $0x48] sm:$0xf]
  %v166 = vld [vmem:[%s2 + $0x4c] sm:$0xf]
  %v167 = vld [vmem:[%s2 + $0x50] sm:$0xf]
  %v168 = vld [vmem:[%s2 + $0x54] sm:$0xf]
  %v169 = vld [vmem:[%s2 + $0x58] sm:$0xf]
  %v170 = vld [vmem:[%s2 + $0x5c] sm:$0xf]
  %v171 = vld [vmem:[%s2 + $0x60] sm:$0xf]
  %v172 = vld [vmem:[%s2 + $0x64] sm:$0xf]
  %v173 = vld [vmem:[%s2 + $0x68] sm:$0xf]
  %v174 = vld [vmem:[%s2 + $0x6c] sm:$0xf]
  %v175 = vld [vmem:[%s2 + $0x70] sm:$0xf]
  %v176 = vld [vmem:[%s2 + $0x74] sm:$0xf]
  %v177 = vld [vmem:[%s2 + $0x78] sm:$0xf]
  %v178 = vld [vmem:[%s2 + $0x7c] sm:$0xf]
  %v179 = vld [vmem:[%s2 + $0x80] sm:$0xf]
  %v180 = vld [vmem:[%s2 + $0x84] sm:$0xf]
  %v181 = vld [vmem:[%s2 + $0x88] sm:$0xf]
  %v182 = vld [vmem:[%s2 + $0x8c] sm:$0xf]
  %v183 = vld [vmem:[%s2 + $0x90] sm:$0xf]
  %v184 = vld [vmem:[%s2 + $0x94] sm:$0xf]
  %v185 = vld [vmem:[%s2 + $0x98] sm:$0xf]
  %v186 = vld [vmem:[%s2 + $0x9c] sm:$0xf]
  %v187 = vld [vmem:[%s2 + $0xa0] sm:$0xf]
  %v188 = vld [vmem:[%s2 + $0xa4] sm:$0xf]
  %v189 = vld [vmem:[%s2 + $0xa8] sm:$0xf]
  %v190 = vld [vmem:[%s2 + $0xac] sm:$0xf]
  %v191 = vld [vmem:[%s2 + $0xb0] sm:$0xf]
  %v192 = vld [vmem:[%s2 + $0xb4] sm:$0xf]
  %v193 = vld [vmem:[%s2 + $0xb8] sm:$0xf]
  %v194 = vld [vmem:[%s2 + $0xbc] sm:$0xf]
  %v195 = vld [vmem:[%s2 + $0xc0] sm:$0xf]
  %v196 = vld [vmem:[%s2 + $0xc4] sm:$0xf]
  %v197 = vld [vmem:[%s2 + $0xc8] sm:$0xf]
  %v198 = vld [vmem:[%s2 + $0xcc] sm:$0xf]
  %v199 = vld [vmem:[%s2 + $0xd0] sm:$0xf]
  %v200 = vld [vmem:[%s2 + $0xd4] sm:$0xf]
  %v201 = vld [vmem:[%s2 + $0xd8] sm:$0xf]
  %v202 = vld [vmem:[%s2 + $0xdc] sm:$0xf]
  %v203 = vld [vmem:[%s2 + $0xe0] sm:$0xf]
  %v204 = vld [vmem:[%s2 + $0xe4] sm:$0xf]
  %v205 = vld [vmem:[%s2 + $0xe8] sm:$0xf]
  %v206 = vld [vmem:[%s2 + $0xec] sm:$0xf]
  %v207 = vld [vmem:[%s2 + $0xf0] sm:$0xf]
  %v208 = vld [vmem:[%s2 + $0xf4] sm:$0xf]
  %v209 = vld [vmem:[%s2 + $0xf8] sm:$0xf]
  %v210 = vld [vmem:[%s2 + $0xfc] sm:$0xf]
  %v211 = vld [vmem:[%s2 + $0x100] sm:$0xf]
  %v212 = vld [vmem:[%s2 + $0x104] sm:$0xf]
  %v213 = vld [vmem:[%s2 + $0x108] sm:$0xf]
  %v214 = vld [vmem:[%s2 + $0x10c] sm:$0xf]
  %v215 = vld [vmem:[%s2 + $0x110] sm:$0xf]
  %v216 = vld [vmem:[%s2 + $0x114] sm:$0xf]
  %v217 = vld [vmem:[%s2 + $0x118] sm:$0xf]
  %v218 = vld [vmem:[%s2 + $0x11c] sm:$0xf]
  %v219 = vld [vmem:[%s2 + $0x120] sm:$0xf]
  %v220 = vld [vmem:[%s2 + $0x124] sm:$0xf]
  %v221 = vld [vmem:[%s2 + $0x128] sm:$0xf]
  %v222 = vld [vmem:[%s2 + $0x12c] sm:$0xf]
  %v223 = vld [vmem:[%s2 + $0x130] sm:$0xf]
  %v224 = vld [vmem:[%s2 + $0x134] sm:$0xf]
  %v225 = vld [vmem:[%s2 + $0x138] sm:$0xf]
  %v226 = vld [vmem:[%s2 + $0x13c] sm:$0xf]
  %v227 = vld [vmem:[%s2 + $0x140] sm:$0xf]
  %v228 = vld [vmem:[%s2 + $0x144] sm:$0xf]
  %v229 = vld [vmem:[%s2 + $0x148] sm:$0xf]
  %v230 = vld [vmem:[%s2 + $0x14c] sm:$0xf]
  %v231 = vld [vmem:[%s2 + $0x150] sm:$0xf]
  %v232 = vld [vmem:[%s2 + $0x154] sm:$0xf]
  %v233 = vld [vmem:[%s2 + $0x158] sm:$0xf]
  %v234 = vld [vmem:[%s2 + $0x15c] sm:$0xf]
  %v235 = vld [vmem:[%s2 + $0x160] sm:$0xf]
  %v236 = vld [vmem:[%s2 + $0x164] sm:$0xf]
  %v237 = vld [vmem:[%s2 + $0x168] sm:$0xf]
  %v238 = vld [vmem:[%s2 + $0x16c] sm:$0xf]
  %v239 = vld [vmem:[%s2 + $0x170] sm:$0xf]
  %v240 = vld [vmem:[%s2 + $0x174] sm:$0xf]
  %v241 = vld [vmem:[%s2 + $0x178] sm:$0xf]
  %v242 = vld [vmem:[%s2 + $0x17c] sm:$0xf]
  %v243 = vld [vmem:[%s2 + $0x180] sm:$0xf]
  %v244 = vld [vmem:[%s2 + $0x184] sm:$0xf]
  %v245 = vld [vmem:[%s2 + $0x188] sm:$0xf]
  %v246 = vld [vmem:[%s2 + $0x18c] sm:$0xf]
  %v247 = vld [vmem:[%s2 + $0x190] sm:$0xf]
  %v248 = vld [vmem:[%s2 + $0x194] sm:$0xf]
  %v249 = vld [vmem:[%s2 + $0x198] sm:$0xf]
  %v250 = vld [vmem:[%s2 + $0x19c] sm:$0xf]
  %v251 = vld [vmem:[%s2 + $0x1a0] sm:$0xf]
  %v252 = vld [vmem:[%s2 + $0x1a4] sm:$0xf]
  %v253 = vld [vmem:[%s2 + $0x1a8] sm:$0xf]
  %v254 = vld [vmem:[%s2 + $0x1ac] sm:$0xf]
  %v255 = vld [vmem:[%s2 + $0x1b0] sm:$0xf]
  %v256 = vld [vmem:[%s2 + $0x1b4] sm:$0xf]
  %v257 = vld [vmem:[%s2 + $0x1b8] sm:$0xf]
  %v258 = vld [vmem:[%s2 + $0x1bc] sm:$0xf]
  %v259 = vld [vmem:[%s2 + $0x1c0] sm:$0xf]
  %v260 = vld [vmem:[%s2 + $0x1c4] sm:$0xf]
  %v261 = vld [vmem:[%s2 + $0x1c8] sm:$0xf]
  %v262 = vld [vmem:[%s2 + $0x1cc] sm:$0xf]
  %v263 = vld [vmem:[%s2 + $0x1d0] sm:$0xf]
  %v264 = vld [vmem:[%s2 + $0x1d4] sm:$0xf]
  %v265 = vld [vmem:[%s2 + $0x1d8] sm:$0xf]
  %v266 = vld [vmem:[%s2 + $0x1dc] sm:$0xf]
  %v267 = vld [vmem:[%s2 + $0x1e0] sm:$0xf]
  %v268 = vld [vmem:[%s2 + $0x1e4] sm:$0xf]
  %v269 = vld [vmem:[%s2 + $0x1e8] sm:$0xf]
  %v270 = vld [vmem:[%s2 + $0x1ec] sm:$0xf]
  %v271 = vld [vmem:[%s2 + $0x1f0] sm:$0xf]
  %v272 = vld [vmem:[%s2 + $0x1f4] sm:$0xf]
  %v273 = vld [vmem:[%s2 + $0x1f8] sm:$0xf]
  %v274 = vld [vmem:[%s2 + $0x1fc] sm:$0xf]
  %v275 = vld [vmem:[%s3] sm:$0xf]
  %v276 = vld [vmem:[%s3 + $0x4] sm:$0xf]
  %v277 = vld [vmem:[%s3 + $0x8] sm:$0xf]
  %v278 = vld [vmem:[%s3 + $0xc] sm:$0xf]
  %v279 = vld [vmem:[%s3 + $0x10] sm:$0xf]
  %v280 = vld [vmem:[%s3 + $0x14] sm:$0xf]
  %v281 = vld [vmem:[%s3 + $0x18] sm:$0xf]
  %v282 = vld [vmem:[%s3 + $0x1c] sm:$0xf]
  %v283 = vld [vmem:[%s3 + $0x20] sm:$0xf]
  %v284 = vld [vmem:[%s3 + $0x24] sm:$0xf]
  %v285 = vld [vmem:[%s3 + $0x28] sm:$0xf]
  %v286 = vld [vmem:[%s3 + $0x2c] sm:$0xf]
  %v287 = vld [vmem:[%s3 + $0x30] sm:$0xf]
  %v288 = vld [vmem:[%s3 + $0x34] sm:$0xf]
  %v289 = vld [vmem:[%s3 + $0x38] sm:$0xf]
  %v290 = vld [vmem:[%s3 + $0x3c] sm:$0xf]
  %v291 = vld [vmem:[%s3 + $0x40] sm:$0xf]
  %v292 = vld [vmem:[%s3 + $0x44] sm:$0xf]
  %v293 = vld [vmem:[%s3 + $0x48] sm:$0xf]
  %v294 = vld [vmem:[%s3 + $0x4c] sm:$0xf]
  %v295 = vld [vmem:[%s3 + $0x50] sm:$0xf]
  %v296 = vld [vmem:[%s3 + $0x54] sm:$0xf]
  %v297 = vld [vmem:[%s3 + $0x58] sm:$0xf]
  %v298 = vld [vmem:[%s3 + $0x5c] sm:$0xf]
  %v299 = vld [vmem:[%s3 + $0x60] sm:$0xf]
  %v300 = vld [vmem:[%s3 + $0x64] sm:$0xf]
  %v301 = vld [vmem:[%s3 + $0x68] sm:$0xf]
  %v302 = vld [vmem:[%s3 + $0x6c] sm:$0xf]
  %v303 = vld [vmem:[%s3 + $0x70] sm:$0xf]
  %v304 = vld [vmem:[%s3 + $0x74] sm:$0xf]
  %v305 = vld [vmem:[%s3 + $0x78] sm:$0xf]
  %v306 = vld [vmem:[%s3 + $0x7c] sm:$0xf]
  %v307 = vld [vmem:[%s3 + $0x80] sm:$0xf]
  %v308 = vld [vmem:[%s3 + $0x84] sm:$0xf]
  %v309 = vld [vmem:[%s3 + $0x88] sm:$0xf]
  %v310 = vld [vmem:[%s3 + $0x8c] sm:$0xf]
  %v311 = vld [vmem:[%s3 + $0x90] sm:$0xf]
  %v312 = vld [vmem:[%s3 + $0x94] sm:$0xf]
  %v313 = vld [vmem:[%s3 + $0x98] sm:$0xf]
  %v314 = vld [vmem:[%s3 + $0x9c] sm:$0xf]
  %v315 = vld [vmem:[%s3 + $0xa0] sm:$0xf]
  %v316 = vld [vmem:[%s3 + $0xa4] sm:$0xf]
  %v317 = vld [vmem:[%s3 + $0xa8] sm:$0xf]
  %v318 = vld [vmem:[%s3 + $0xac] sm:$0xf]
  %v319 = vld [vmem:[%s3 + $0xb0] sm:$0xf]
  %v320 = vld [vmem:[%s3 + $0xb4] sm:$0xf]
  %v321 = vld [vmem:[%s3 + $0xb8] sm:$0xf]
  %v322 = vld [vmem:[%s3 + $0xbc] sm:$0xf]
  %v323 = vld [vmem:[%s3 + $0xc0] sm:$0xf]
  %v324 = vld [vmem:[%s3 + $0xc4] sm:$0xf]
  %v325 = vld [vmem:[%s3 + $0xc8] sm:$0xf]
  %v326 = vld [vmem:[%s3 + $0xcc] sm:$0xf]
  %v327 = vld [vmem:[%s3 + $0xd0] sm:$0xf]
  %v328 = vld [vmem:[%s3 + $0xd4] sm:$0xf]
  %v329 = vld [vmem:[%s3 + $0xd8] sm:$0xf]
  %v330 = vld [vmem:[%s3 + $0xdc] sm:$0xf]
  %v331 = vld [vmem:[%s3 + $0xe0] sm:$0xf]
  %v332 = vld [vmem:[%s3 + $0xe4] sm:$0xf]
  %v333 = vld [vmem:[%s3 + $0xe8] sm:$0xf]
  %v334 = vld [vmem:[%s3 + $0xec] sm:$0xf]
  %v335 = vld [vmem:[%s3 + $0xf0] sm:$0xf]
  %v336 = vld [vmem:[%s3 + $0xf4] sm:$0xf]
  %v337 = vld [vmem:[%s3 + $0xf8] sm:$0xf]
  %v338 = vld [vmem:[%s3 + $0xfc] sm:$0xf]
  %v339 = vld [vmem:[%s3 + $0x100] sm:$0xf]
  %v340 = vld [vmem:[%s3 + $0x104] sm:$0xf]
  %v341 = vld [vmem:[%s3 + $0x108] sm:$0xf]
  %v342 = vld [vmem:[%s3 + $0x10c] sm:$0xf]
  %v343 = vld [vmem:[%s3 + $0x110] sm:$0xf]
  %v344 = vld [vmem:[%s3 + $0x114] sm:$0xf]
  %v345 = vld [vmem:[%s3 + $0x118] sm:$0xf]
  %v346 = vld [vmem:[%s3 + $0x11c] sm:$0xf]
  %v347 = vld [vmem:[%s3 + $0x120] sm:$0xf]
  %v348 = vld [vmem:[%s3 + $0x124] sm:$0xf]
  %v349 = vld [vmem:[%s3 + $0x128] sm:$0xf]
  %v350 = vld [vmem:[%s3 + $0x12c] sm:$0xf]
  %v351 = vld [vmem:[%s3 + $0x130] sm:$0xf]
  %v352 = vld [vmem:[%s3 + $0x134] sm:$0xf]
  %v353 = vld [vmem:[%s3 + $0x138] sm:$0xf]
  %v354 = vld [vmem:[%s3 + $0x13c] sm:$0xf]
  %v355 = vld [vmem:[%s3 + $0x140] sm:$0xf]
  %v356 = vld [vmem:[%s3 + $0x144] sm:$0xf]
  %v357 = vld [vmem:[%s3 + $0x148] sm:$0xf]
  %v358 = vld [vmem:[%s3 + $0x14c] sm:$0xf]
  %v359 = vld [vmem:[%s3 + $0x150] sm:$0xf]
  %v360 = vld [vmem:[%s3 + $0x154] sm:$0xf]
  %v361 = vld [vmem:[%s3 + $0x158] sm:$0xf]
  %v362 = vld [vmem:[%s3 + $0x15c] sm:$0xf]
  %v363 = vld [vmem:[%s3 + $0x160] sm:$0xf]
  %v364 = vld [vmem:[%s3 + $0x164] sm:$0xf]
  %v365 = vld [vmem:[%s3 + $0x168] sm:$0xf]
  %v366 = vld [vmem:[%s3 + $0x16c] sm:$0xf]
  %v367 = vld [vmem:[%s3 + $0x170] sm:$0xf]
  %v368 = vld [vmem:[%s3 + $0x174] sm:$0xf]
  %v369 = vld [vmem:[%s3 + $0x178] sm:$0xf]
  %v370 = vld [vmem:[%s3 + $0x17c] sm:$0xf]
  %v371 = vld [vmem:[%s3 + $0x180] sm:$0xf]
  %v372 = vld [vmem:[%s3 + $0x184] sm:$0xf]
  %v373 = vld [vmem:[%s3 + $0x188] sm:$0xf]
  %v374 = vld [vmem:[%s3 + $0x18c] sm:$0xf]
  %v375 = vld [vmem:[%s3 + $0x190] sm:$0xf]
  %v376 = vld [vmem:[%s3 + $0x194] sm:$0xf]
  %v377 = vld [vmem:[%s3 + $0x198] sm:$0xf]
  %v378 = vld [vmem:[%s3 + $0x19c] sm:$0xf]
  %v379 = vld [vmem:[%s3 + $0x1a0] sm:$0xf]
  %v380 = vld [vmem:[%s3 + $0x1a4] sm:$0xf]
  %v381 = vld [vmem:[%s3 + $0x1a8] sm:$0xf]
  %v382 = vld [vmem:[%s3 + $0x1ac] sm:$0xf]
  %v383 = vld [vmem:[%s3 + $0x1b0] sm:$0xf]
  %v384 = vld [vmem:[%s3 + $0x1b4] sm:$0xf]
  %v385 = vld [vmem:[%s3 + $0x1b8] sm:$0xf]
  %v386 = vld [vmem:[%s3 + $0x1bc] sm:$0xf]
  %v387 = vld [vmem:[%s3 + $0x1c0] sm:$0xf]
  %v388 = vld [vmem:[%s3 + $0x1c4] sm:$0xf]
  %v389 = vld [vmem:[%s3 + $0x1c8] sm:$0xf]
  %v390 = vld [vmem:[%s3 + $0x1cc] sm:$0xf]
  %v391 = vld [vmem:[%s3 + $0x1d0] sm:$0xf]
  %v392 = vld [vmem:[%s3 + $0x1d4] sm:$0xf]
  %v393 = vld [vmem:[%s3 + $0x1d8] sm:$0xf]
  %v394 = vld [vmem:[%s3 + $0x1dc] sm:$0xf]
  %v395 = vld [vmem:[%s3 + $0x1e0] sm:$0xf]
  %v396 = vld [vmem:[%s3 + $0x1e4] sm:$0xf]
  %v397 = vld [vmem:[%s3 + $0x1e8] sm:$0xf]
  %v398 = vld [vmem:[%s3 + $0x1ec] sm:$0xf]
  %v399 = vld [vmem:[%s3 + $0x1f0] sm:$0xf]
  %v400 = vld [vmem:[%s3 + $0x1f4] sm:$0xf]
  %v401 = vld [vmem:[%s3 + $0x1f8] sm:$0xf]
  %v402 = vld [vmem:[%s3 + $0x1fc] sm:$0xf]
  %v531 = vunpack.c.l.b16 %v275
  %v532 = vunpack.c.l.b16 %v276
  %v533 = vunpack.c.l.b16 %v277
  %v534 = vunpack.c.l.b16 %v278
  %v535 = vunpack.c.l.b16 %v279
  %v536 = vunpack.c.l.b16 %v280
  %v537 = vunpack.c.l.b16 %v281
  %v538 = vunpack.c.l.b16 %v282
  %v539 = vunpack.c.l.b16 %v283
  %v540 = vunpack.c.l.b16 %v284
  %v541 = vunpack.c.l.b16 %v285
  %v542 = vunpack.c.l.b16 %v286
  %v543 = vunpack.c.l.b16 %v287
  %v544 = vunpack.c.l.b16 %v288
  %v545 = vunpack.c.l.b16 %v289
  %v546 = vunpack.c.l.b16 %v290
  %v547 = vunpack.c.l.b16 %v291
  %v548 = vunpack.c.l.b16 %v292
  %v549 = vunpack.c.l.b16 %v293
  %v550 = vunpack.c.l.b16 %v294
  %v551 = vunpack.c.l.b16 %v295
  %v552 = vunpack.c.l.b16 %v296
  %v553 = vunpack.c.l.b16 %v297
  %v554 = vunpack.c.l.b16 %v298
  %v555 = vunpack.c.l.b16 %v299
  %v556 = vunpack.c.l.b16 %v300
  %v557 = vunpack.c.l.b16 %v301
  %v558 = vunpack.c.l.b16 %v302
  %v559 = vunpack.c.l.b16 %v303
  %v560 = vunpack.c.l.b16 %v304
  %v561 = vunpack.c.l.b16 %v305
  %v562 = vunpack.c.l.b16 %v306
  %v563 = vunpack.c.l.b16 %v307
  %v564 = vunpack.c.l.b16 %v308
  %v565 = vunpack.c.l.b16 %v309
  %v566 = vunpack.c.l.b16 %v310
  %v567 = vunpack.c.l.b16 %v311
  %v568 = vunpack.c.l.b16 %v312
  %v569 = vunpack.c.l.b16 %v313
  %v570 = vunpack.c.l.b16 %v314
  %v571 = vunpack.c.l.b16 %v315
  %v572 = vunpack.c.l.b16 %v316
  %v573 = vunpack.c.l.b16 %v317
  %v574 = vunpack.c.l.b16 %v318
  %v575 = vunpack.c.l.b16 %v319
  %v576 = vunpack.c.l.b16 %v320
  %v577 = vunpack.c.l.b16 %v321
  %v578 = vunpack.c.l.b16 %v322
  %v579 = vunpack.c.l.b16 %v323
  %v580 = vunpack.c.l.b16 %v324
  %v581 = vunpack.c.l.b16 %v325
  %v582 = vunpack.c.l.b16 %v326
  %v583 = vunpack.c.l.b16 %v327
  %v584 = vunpack.c.l.b16 %v328
  %v585 = vunpack.c.l.b16 %v329
  %v586 = vunpack.c.l.b16 %v330
  %v587 = vunpack.c.l.b16 %v331
  %v588 = vunpack.c.l.b16 %v332
  %v589 = vunpack.c.l.b16 %v333
  %v590 = vunpack.c.l.b16 %v334
  %v591 = vunpack.c.l.b16 %v335
  %v592 = vunpack.c.l.b16 %v336
  %v593 = vunpack.c.l.b16 %v337
  %v594 = vunpack.c.l.b16 %v338
  %v595 = vunpack.c.l.b16 %v339
  %v596 = vunpack.c.l.b16 %v340
  %v597 = vunpack.c.l.b16 %v341
  %v598 = vunpack.c.l.b16 %v342
  %v599 = vunpack.c.l.b16 %v343
  %v600 = vunpack.c.l.b16 %v344
  %v601 = vunpack.c.l.b16 %v345
  %v602 = vunpack.c.l.b16 %v346
  %v603 = vunpack.c.l.b16 %v347
  %v604 = vunpack.c.l.b16 %v348
  %v605 = vunpack.c.l.b16 %v349
  %v606 = vunpack.c.l.b16 %v350
  %v607 = vunpack.c.l.b16 %v351
  %v608 = vunpack.c.l.b16 %v352
  %v609 = vunpack.c.l.b16 %v353
  %v610 = vunpack.c.l.b16 %v354
  %v611 = vunpack.c.l.b16 %v355
  %v612 = vunpack.c.l.b16 %v356
  %v613 = vunpack.c.l.b16 %v357
  %v614 = vunpack.c.l.b16 %v358
  %v615 = vunpack.c.l.b16 %v359
  %v616 = vunpack.c.l.b16 %v360
  %v617 = vunpack.c.l.b16 %v361
  %v618 = vunpack.c.l.b16 %v362
  %v619 = vunpack.c.l.b16 %v363
  %v620 = vunpack.c.l.b16 %v364
  %v621 = vunpack.c.l.b16 %v365
  %v622 = vunpack.c.l.b16 %v366
  %v623 = vunpack.c.l.b16 %v367
  %v624 = vunpack.c.l.b16 %v368
  %v625 = vunpack.c.l.b16 %v369
  %v626 = vunpack.c.l.b16 %v370
  %v627 = vunpack.c.l.b16 %v371
  %v628 = vunpack.c.l.b16 %v372
  %v629 = vunpack.c.l.b16 %v373
  %v630 = vunpack.c.l.b16 %v374
  %v631 = vunpack.c.l.b16 %v375
  %v632 = vunpack.c.l.b16 %v376
  %v633 = vunpack.c.l.b16 %v377
  %v634 = vunpack.c.l.b16 %v378
  %v635 = vunpack.c.l.b16 %v379
  %v636 = vunpack.c.l.b16 %v380
  %v637 = vunpack.c.l.b16 %v381
  %v638 = vunpack.c.l.b16 %v382
  %v639 = vunpack.c.l.b16 %v383
  %v640 = vunpack.c.l.b16 %v384
  %v641 = vunpack.c.l.b16 %v385
  %v642 = vunpack.c.l.b16 %v386
  %v643 = vunpack.c.l.b16 %v387
  %v644 = vunpack.c.l.b16 %v388
  %v645 = vunpack.c.l.b16 %v389
  %v646 = vunpack.c.l.b16 %v390
  %v647 = vunpack.c.l.b16 %v391
  %v648 = vunpack.c.l.b16 %v392
  %v649 = vunpack.c.l.b16 %v393
  %v650 = vunpack.c.l.b16 %v394
  %v651 = vunpack.c.l.b16 %v395
  %v652 = vunpack.c.l.b16 %v396
  %v653 = vunpack.c.l.b16 %v397
  %v654 = vunpack.c.l.b16 %v398
  %v655 = vunpack.c.l.b16 %v399
  %v656 = vunpack.c.l.b16 %v400
  %v657 = vunpack.c.l.b16 %v401
  %v658 = vunpack.c.l.b16 %v402
  %v659 = vpack.c.b16 %v532, %v531
  %v660 = vpack.c.b16 %v534, %v533
  %v661 = vpack.c.b16 %v536, %v535
  %v662 = vpack.c.b16 %v538, %v537
  %v663 = vpack.c.b16 %v540, %v539
  %v664 = vpack.c.b16 %v542, %v541
  %v665 = vpack.c.b16 %v544, %v543
  %v666 = vpack.c.b16 %v546, %v545
  %v667 = vpack.c.b16 %v548, %v547
  %v668 = vpack.c.b16 %v550, %v549
  %v669 = vpack.c.b16 %v552, %v551
  %v670 = vpack.c.b16 %v554, %v553
  %v671 = vpack.c.b16 %v556, %v555
  %v672 = vpack.c.b16 %v558, %v557
  %v673 = vpack.c.b16 %v560, %v559
  %v674 = vpack.c.b16 %v562, %v561
  %v675 = vpack.c.b16 %v564, %v563
  %v676 = vpack.c.b16 %v566, %v565
  %v677 = vpack.c.b16 %v568, %v567
  %v678 = vpack.c.b16 %v570, %v569
  %v679 = vpack.c.b16 %v572, %v571
  %v680 = vpack.c.b16 %v574, %v573
  %v681 = vpack.c.b16 %v576, %v575
  %v682 = vpack.c.b16 %v578, %v577
  %v683 = vpack.c.b16 %v580, %v579
  %v684 = vpack.c.b16 %v582, %v581
  %v685 = vpack.c.b16 %v584, %v583
  %v686 = vpack.c.b16 %v586, %v585
  %v687 = vpack.c.b16 %v588, %v587
  %v688 = vpack.c.b16 %v590, %v589
  %v689 = vpack.c.b16 %v592, %v591
  %v690 = vpack.c.b16 %v594, %v593
  %v691 = vpack.c.b16 %v596, %v595
  %v692 = vpack.c.b16 %v598, %v597
  %v693 = vpack.c.b16 %v600, %v599
  %v694 = vpack.c.b16 %v602, %v601
  %v695 = vpack.c.b16 %v604, %v603
  %v696 = vpack.c.b16 %v606, %v605
  %v697 = vpack.c.b16 %v608, %v607
  %v698 = vpack.c.b16 %v610, %v609
  %v699 = vpack.c.b16 %v612, %v611
  %v700 = vpack.c.b16 %v614, %v613
  %v701 = vpack.c.b16 %v616, %v615
  %v702 = vpack.c.b16 %v618, %v617
  %v703 = vpack.c.b16 %v620, %v619
  %v704 = vpack.c.b16 %v622, %v621
  %v705 = vpack.c.b16 %v624, %v623
  %v706 = vpack.c.b16 %v626, %v625
  %v707 = vpack.c.b16 %v628, %v627
  %v708 = vpack.c.b16 %v630, %v629
  %v709 = vpack.c.b16 %v632, %v631
  %v710 = vpack.c.b16 %v634, %v633
  %v711 = vpack.c.b16 %v636, %v635
  %v712 = vpack.c.b16 %v638, %v637
  %v713 = vpack.c.b16 %v640, %v639
  %v714 = vpack.c.b16 %v642, %v641
  %v715 = vpack.c.b16 %v644, %v643
  %v716 = vpack.c.b16 %v646, %v645
  %v717 = vpack.c.b16 %v648, %v647
  %v718 = vpack.c.b16 %v650, %v649
  %v719 = vpack.c.b16 %v652, %v651
  %v720 = vpack.c.b16 %v654, %v653
  %v721 = vpack.c.b16 %v656, %v655
  %v722 = vpack.c.b16 %v658, %v657
  %787 = vmatprep.subr.bf16.mxu0 0
  %788 = vmatpush1.bf16.msra.mxu0 %v659
  %789 = vmatprep.subr.bf16.mxu0 0
  %790 = vmatpush1.bf16.msra.mxu0 %v660
  %791 = vmatprep.subr.bf16.mxu0 0
  %792 = vmatpush1.bf16.msra.mxu0 %v661
  %793 = vmatprep.subr.bf16.mxu0 0
  %794 = vmatpush1.bf16.msra.mxu0 %v662
  %795 = vmatprep.subr.bf16.mxu0 0
  %796 = vmatpush1.bf16.msra.mxu0 %v663
  %797 = vmatprep.subr.bf16.mxu0 0
  %798 = vmatpush1.bf16.msra.mxu0 %v664
  %799 = vmatprep.subr.bf16.mxu0 0
  %800 = vmatpush1.bf16.msra.mxu0 %v665
  %801 = vmatprep.subr.bf16.mxu0 0
  %802 = vmatpush1.bf16.msra.mxu0 %v666
  %803 = vmatprep.subr.bf16.mxu0 0
  %804 = vmatpush1.bf16.msra.mxu0 %v667
  %805 = vmatprep.subr.bf16.mxu0 0
  %806 = vmatpush1.bf16.msra.mxu0 %v668
  %807 = vmatprep.subr.bf16.mxu0 0
  %808 = vmatpush1.bf16.msra.mxu0 %v669
  %809 = vmatprep.subr.bf16.mxu0 0
  %810 = vmatpush1.bf16.msra.mxu0 %v670
  %811 = vmatprep.subr.bf16.mxu0 0
  %812 = vmatpush1.bf16.msra.mxu0 %v671
  %813 = vmatprep.subr.bf16.mxu0 0
  %814 = vmatpush1.bf16.msra.mxu0 %v672
  %815 = vmatprep.subr.bf16.mxu0 0
  %816 = vmatpush1.bf16.msra.mxu0 %v673
  %817 = vmatprep.subr.bf16.mxu0 0
  %818 = vmatpush1.bf16.msra.mxu0 %v674
  %819 = vmatprep.mubr.bf16.mxu0 %v140
  %820 = vmatmul.mubr.bf16.gmra.mrb[0].mxu0 %v139
  %v821 = vpop.f32.mrb[0].mxu0
  %v822 = vadd.f32 0.0, %v821
  %v823 = vpop.f32.mrb[0].mxu0
  %v824 = vpop.f32.mrb[0].mxu0
  %v825 = vpop.f32.mrb[0].mxu0
  %826 = vdwg.mxu0
  %827 = vmatprep.subr.bf16.mxu0 0
  %828 = vmatpush1.bf16.msra.mxu0 %v675
  %829 = vmatprep.subr.bf16.mxu0 0
  %830 = vmatpush1.bf16.msra.mxu0 %v676
  %831 = vmatprep.subr.bf16.mxu0 0
  %832 = vmatpush1.bf16.msra.mxu0 %v677
  %833 = vmatprep.subr.bf16.mxu0 0
  %834 = vmatpush1.bf16.msra.mxu0 %v678
  %835 = vmatprep.subr.bf16.mxu0 0
  %836 = vmatpush1.bf16.msra.mxu0 %v679
  %837 = vmatprep.subr.bf16.mxu0 0
  %838 = vmatpush1.bf16.msra.mxu0 %v680
  %839 = vmatprep.subr.bf16.mxu0 0
  %840 = vmatpush1.bf16.msra.mxu0 %v681
  %841 = vmatprep.subr.bf16.mxu0 0
  %842 = vmatpush1.bf16.msra.mxu0 %v682
  %843 = vmatprep.subr.bf16.mxu0 0
  %844 = vmatpush1.bf16.msra.mxu0 %v683
  %845 = vmatprep.subr.bf16.mxu0 0
  %846 = vmatpush1.bf16.msra.mxu0 %v684
  %847 = vmatprep.subr.bf16.mxu0 0
  %848 = vmatpush1.bf16.msra.mxu0 %v685
  %849 = vmatprep.subr.bf16.mxu0 0
  %850 = vmatpush1.bf16.msra.mxu0 %v686
  %851 = vmatprep.subr.bf16.mxu0 0
  %852 = vmatpush1.bf16.msra.mxu0 %v687
  %853 = vmatprep.subr.bf16.mxu0 0
  %854 = vmatpush1.bf16.msra.mxu0 %v688
  %855 = vmatprep.subr.bf16.mxu0 0
  %856 = vmatpush1.bf16.msra.mxu0 %v689
  %857 = vmatprep.subr.bf16.mxu0 0
  %858 = vmatpush1.bf16.msra.mxu0 %v690
  %859 = vmatprep.mubr.bf16.mxu0 %v142
  %860 = vmatmul.mubr.bf16.gmra.mrb[0].mxu0 %v141
  %v861 = vpop.f32.mrb[0].mxu0
  %v862 = vadd.f32 %v822, %v861
  %v863 = vpop.f32.mrb[0].mxu0
  %v864 = vpop.f32.mrb[0].mxu0
  %v865 = vpop.f32.mrb[0].mxu0
  %866 = vdwg.mxu0
  %867 = vmatprep.subr.bf16.mxu0 0
  %868 = vmatpush1.bf16.msra.mxu0 %v691
  %869 = vmatprep.subr.bf16.mxu0 0
  %870 = vmatpush1.bf16.msra.mxu0 %v692
  %871 = vmatprep.subr.bf16.mxu0 0
  %872 = vmatpush1.bf16.msra.mxu0 %v693
  %873 = vmatprep.subr.bf16.mxu0 0
  %874 = vmatpush1.bf16.msra.mxu0 %v694
  %875 = vmatprep.subr.bf16.mxu0 0
  %876 = vmatpush1.bf16.msra.mxu0 %v695
  %877 = vmatprep.subr.bf16.mxu0 0
  %878 = vmatpush1.bf16.msra.mxu0 %v696
  %879 = vmatprep.subr.bf16.mxu0 0
  %880 = vmatpush1.bf16.msra.mxu0 %v697
  %881 = vmatprep.subr.bf16.mxu0 0
  %882 = vmatpush1.bf16.msra.mxu0 %v698
  %883 = vmatprep.subr.bf16.mxu0 0
  %884 = vmatpush1.bf16.msra.mxu0 %v699
  %885 = vmatprep.subr.bf16.mxu0 0
  %886 = vmatpush1.bf16.msra.mxu0 %v700
  %887 = vmatprep.subr.bf16.mxu0 0
  %888 = vmatpush1.bf16.msra.mxu0 %v701
  %889 = vmatprep.subr.bf16.mxu0 0
  %890 = vmatpush1.bf16.msra.mxu0 %v702
  %891 = vmatprep.subr.bf16.mxu0 0
  %892 = vmatpush1.bf16.msra.mxu0 %v703
  %893 = vmatprep.subr.bf16.mxu0 0
  %894 = vmatpush1.bf16.msra.mxu0 %v704
  %895 = vmatprep.subr.bf16.mxu0 0
  %896 = vmatpush1.bf16.msra.mxu0 %v705
  %897 = vmatprep.subr.bf16.mxu0 0
  %898 = vmatpush1.bf16.msra.mxu0 %v706
  %899 = vmatprep.mubr.bf16.mxu0 %v144
  %900 = vmatmul.mubr.bf16.gmra.mrb[0].mxu0 %v143
  %v901 = vpop.f32.mrb[0].mxu0
  %v902 = vadd.f32 %v862, %v901
  %v903 = vpop.f32.mrb[0].mxu0
  %v904 = vpop.f32.mrb[0].mxu0
  %v905 = vpop.f32.mrb[0].mxu0
  %906 = vdwg.mxu0
  %907 = vmatprep.subr.bf16.mxu0 0
  %908 = vmatpush1.bf16.msra.mxu0 %v707
  %909 = vmatprep.subr.bf16.mxu0 0
  %910 = vmatpush1.bf16.msra.mxu0 %v708
  %911 = vmatprep.subr.bf16.mxu0 0
  %912 = vmatpush1.bf16.msra.mxu0 %v709
  %913 = vmatprep.subr.bf16.mxu0 0
  %914 = vmatpush1.bf16.msra.mxu0 %v710
  %915 = vmatprep.subr.bf16.mxu0 0
  %916 = vmatpush1.bf16.msra.mxu0 %v711
  %917 = vmatprep.subr.bf16.mxu0 0
  %918 = vmatpush1.bf16.msra.mxu0 %v712
  %919 = vmatprep.subr.bf16.mxu0 0
  %920 = vmatpush1.bf16.msra.mxu0 %v713
  %921 = vmatprep.subr.bf16.mxu0 0
  %922 = vmatpush1.bf16.msra.mxu0 %v714
  %923 = vmatprep.subr.bf16.mxu0 0
  %924 = vmatpush1.bf16.msra.mxu0 %v715
  %925 = vmatprep.subr.bf16.mxu0 0
  %926 = vmatpush1.bf16.msra.mxu0 %v716
  %927 = vmatprep.subr.bf16.mxu0 0
  %928 = vmatpush1.bf16.msra.mxu0 %v717
  %929 = vmatprep.subr.bf16.mxu0 0
  %930 = vmatpush1.bf16.msra.mxu0 %v718
  %931 = vmatprep.subr.bf16.mxu0 0
  %932 = vmatpush1.bf16.msra.mxu0 %v719
  %933 = vmatprep.subr.bf16.mxu0 0
  %934 = vmatpush1.bf16.msra.mxu0 %v720
  %935 = vmatprep.subr.bf16.mxu0 0
  %936 = vmatpush1.bf16.msra.mxu0 %v721
  %937 = vmatprep.subr.bf16.mxu0 0
  %938 = vmatpush1.bf16.msra.mxu0 %v722
  %939 = vmatprep.mubr.bf16.mxu0 %v146
  %940 = vmatmul.mubr.bf16.gmra.mrb[0].mxu0 %v145
  %v941 = vpop.f32.mrb[0].mxu0
  %v942 = vadd.f32 %v902, %v941
  %v943 = vpop.f32.mrb[0].mxu0
  %v944 = vpop.f32.mrb[0].mxu0
  %v945 = vpop.f32.mrb[0].mxu0
  %946 = vdwg.mxu0
  %v1075 = vunpack.c.l.b16 %v147
  %v1076 = vunpack.c.l.b16 %v148
  %v1077 = vunpack.c.l.b16 %v149
  %v1078 = vunpack.c.l.b16 %v150
  %v1079 = vunpack.c.l.b16 %v151
  %v1080 = vunpack.c.l.b16 %v152
  %v1081 = vunpack.c.l.b16 %v153
  %v1082 = vunpack.c.l.b16 %v154
  %v1083 = vunpack.c.l.b16 %v155
  %v1084 = vunpack.c.l.b16 %v156
  %v1085 = vunpack.c.l.b16 %v157
  %v1086 = vunpack.c.l.b16 %v158
  %v1087 = vunpack.c.l.b16 %v159
  %v1088 = vunpack.c.l.b16 %v160
  %v1089 = vunpack.c.l.b16 %v161
  %v1090 = vunpack.c.l.b16 %v162
  %v1091 = vunpack.c.l.b16 %v163
  %v1092 = vunpack.c.l.b16 %v164
  %v1093 = vunpack.c.l.b16 %v165
  %v1094 = vunpack.c.l.b16 %v166
  %v1095 = vunpack.c.l.b16 %v167
  %v1096 = vunpack.c.l.b16 %v168
  %v1097 = vunpack.c.l.b16 %v169
  %v1098 = vunpack.c.l.b16 %v170
  %v1099 = vunpack.c.l.b16 %v171
  %v1100 = vunpack.c.l.b16 %v172
  %v1101 = vunpack.c.l.b16 %v173
  %v1102 = vunpack.c.l.b16 %v174
  %v1103 = vunpack.c.l.b16 %v175
  %v1104 = vunpack.c.l.b16 %v176
  %v1105 = vunpack.c.l.b16 %v177
  %v1106 = vunpack.c.l.b16 %v178
  %v1107 = vunpack.c.l.b16 %v179
  %v1108 = vunpack.c.l.b16 %v180
  %v1109 = vunpack.c.l.b16 %v181
  %v1110 = vunpack.c.l.b16 %v182
  %v1111 = vunpack.c.l.b16 %v183
  %v1112 = vunpack.c.l.b16 %v184
  %v1113 = vunpack.c.l.b16 %v185
  %v1114 = vunpack.c.l.b16 %v186
  %v1115 = vunpack.c.l.b16 %v187
  %v1116 = vunpack.c.l.b16 %v188
  %v1117 = vunpack.c.l.b16 %v189
  %v1118 = vunpack.c.l.b16 %v190
  %v1119 = vunpack.c.l.b16 %v191
  %v1120 = vunpack.c.l.b16 %v192
  %v1121 = vunpack.c.l.b16 %v193
  %v1122 = vunpack.c.l.b16 %v194
  %v1123 = vunpack.c.l.b16 %v195
  %v1124 = vunpack.c.l.b16 %v196
  %v1125 = vunpack.c.l.b16 %v197
  %v1126 = vunpack.c.l.b16 %v198
  %v1127 = vunpack.c.l.b16 %v199
  %v1128 = vunpack.c.l.b16 %v200
  %v1129 = vunpack.c.l.b16 %v201
  %v1130 = vunpack.c.l.b16 %v202
  %v1131 = vunpack.c.l.b16 %v203
  %v1132 = vunpack.c.l.b16 %v204
  %v1133 = vunpack.c.l.b16 %v205
  %v1134 = vunpack.c.l.b16 %v206
  %v1135 = vunpack.c.l.b16 %v207
  %v1136 = vunpack.c.l.b16 %v208
  %v1137 = vunpack.c.l.b16 %v209
  %v1138 = vunpack.c.l.b16 %v210
  %v1139 = vunpack.c.l.b16 %v211
  %v1140 = vunpack.c.l.b16 %v212
  %v1141 = vunpack.c.l.b16 %v213
  %v1142 = vunpack.c.l.b16 %v214
  %v1143 = vunpack.c.l.b16 %v215
  %v1144 = vunpack.c.l.b16 %v216
  %v1145 = vunpack.c.l.b16 %v217
  %v1146 = vunpack.c.l.b16 %v218
  %v1147 = vunpack.c.l.b16 %v219
  %v1148 = vunpack.c.l.b16 %v220
  %v1149 = vunpack.c.l.b16 %v221
  %v1150 = vunpack.c.l.b16 %v222
  %v1151 = vunpack.c.l.b16 %v223
  %v1152 = vunpack.c.l.b16 %v224
  %v1153 = vunpack.c.l.b16 %v225
  %v1154 = vunpack.c.l.b16 %v226
  %v1155 = vunpack.c.l.b16 %v227
  %v1156 = vunpack.c.l.b16 %v228
  %v1157 = vunpack.c.l.b16 %v229
  %v1158 = vunpack.c.l.b16 %v230
  %v1159 = vunpack.c.l.b16 %v231
  %v1160 = vunpack.c.l.b16 %v232
  %v1161 = vunpack.c.l.b16 %v233
  %v1162 = vunpack.c.l.b16 %v234
  %v1163 = vunpack.c.l.b16 %v235
  %v1164 = vunpack.c.l.b16 %v236
  %v1165 = vunpack.c.l.b16 %v237
  %v1166 = vunpack.c.l.b16 %v238
  %v1167 = vunpack.c.l.b16 %v239
  %v1168 = vunpack.c.l.b16 %v240
  %v1169 = vunpack.c.l.b16 %v241
  %v1170 = vunpack.c.l.b16 %v242
  %v1171 = vunpack.c.l.b16 %v243
  %v1172 = vunpack.c.l.b16 %v244
  %v1173 = vunpack.c.l.b16 %v245
  %v1174 = vunpack.c.l.b16 %v246
  %v1175 = vunpack.c.l.b16 %v247
  %v1176 = vunpack.c.l.b16 %v248
  %v1177 = vunpack.c.l.b16 %v249
  %v1178 = vunpack.c.l.b16 %v250
  %v1179 = vunpack.c.l.b16 %v251
  %v1180 = vunpack.c.l.b16 %v252
  %v1181 = vunpack.c.l.b16 %v253
  %v1182 = vunpack.c.l.b16 %v254
  %v1183 = vunpack.c.l.b16 %v255
  %v1184 = vunpack.c.l.b16 %v256
  %v1185 = vunpack.c.l.b16 %v257
  %v1186 = vunpack.c.l.b16 %v258
  %v1187 = vunpack.c.l.b16 %v259
  %v1188 = vunpack.c.l.b16 %v260
  %v1189 = vunpack.c.l.b16 %v261
  %v1190 = vunpack.c.l.b16 %v262
  %v1191 = vunpack.c.l.b16 %v263
  %v1192 = vunpack.c.l.b16 %v264
  %v1193 = vunpack.c.l.b16 %v265
  %v1194 = vunpack.c.l.b16 %v266
  %v1195 = vunpack.c.l.b16 %v267
  %v1196 = vunpack.c.l.b16 %v268
  %v1197 = vunpack.c.l.b16 %v269
  %v1198 = vunpack.c.l.b16 %v270
  %v1199 = vunpack.c.l.b16 %v271
  %v1200 = vunpack.c.l.b16 %v272
  %v1201 = vunpack.c.l.b16 %v273
  %v1202 = vunpack.c.l.b16 %v274
  %v1203 = vpack.c.b16 %v1076, %v1075
  %v1204 = vpack.c.b16 %v1078, %v1077
  %v1205 = vpack.c.b16 %v1080, %v1079
  %v1206 = vpack.c.b16 %v1082, %v1081
  %v1207 = vpack.c.b16 %v1084, %v1083
  %v1208 = vpack.c.b16 %v1086, %v1085
  %v1209 = vpack.c.b16 %v1088, %v1087
  %v1210 = vpack.c.b16 %v1090, %v1089
  %v1211 = vpack.c.b16 %v1092, %v1091
  %v1212 = vpack.c.b16 %v1094, %v1093
  %v1213 = vpack.c.b16 %v1096, %v1095
  %v1214 = vpack.c.b16 %v1098, %v1097
  %v1215 = vpack.c.b16 %v1100, %v1099
  %v1216 = vpack.c.b16 %v1102, %v1101
  %v1217 = vpack.c.b16 %v1104, %v1103
  %v1218 = vpack.c.b16 %v1106, %v1105
  %v1219 = vpack.c.b16 %v1108, %v1107
  %v1220 = vpack.c.b16 %v1110, %v1109
  %v1221 = vpack.c.b16 %v1112, %v1111
  %v1222 = vpack.c.b16 %v1114, %v1113
  %v1223 = vpack.c.b16 %v1116, %v1115
  %v1224 = vpack.c.b16 %v1118, %v1117
  %v1225 = vpack.c.b16 %v1120, %v1119
  %v1226 = vpack.c.b16 %v1122, %v1121
  %v1227 = vpack.c.b16 %v1124, %v1123
  %v1228 = vpack.c.b16 %v1126, %v1125
  %v1229 = vpack.c.b16 %v1128, %v1127
  %v1230 = vpack.c.b16 %v1130, %v1129
  %v1231 = vpack.c.b16 %v1132, %v1131
  %v1232 = vpack.c.b16 %v1134, %v1133
  %v1233 = vpack.c.b16 %v1136, %v1135
  %v1234 = vpack.c.b16 %v1138, %v1137
  %v1235 = vpack.c.b16 %v1140, %v1139
  %v1236 = vpack.c.b16 %v1142, %v1141
  %v1237 = vpack.c.b16 %v1144, %v1143
  %v1238 = vpack.c.b16 %v1146, %v1145
  %v1239 = vpack.c.b16 %v1148, %v1147
  %v1240 = vpack.c.b16 %v1150, %v1149
  %v1241 = vpack.c.b16 %v1152, %v1151
  %v1242 = vpack.c.b16 %v1154, %v1153
  %v1243 = vpack.c.b16 %v1156, %v1155
  %v1244 = vpack.c.b16 %v1158, %v1157
  %v1245 = vpack.c.b16 %v1160, %v1159
  %v1246 = vpack.c.b16 %v1162, %v1161
  %v1247 = vpack.c.b16 %v1164, %v1163
  %v1248 = vpack.c.b16 %v1166, %v1165
  %v1249 = vpack.c.b16 %v1168, %v1167
  %v1250 = vpack.c.b16 %v1170, %v1169
  %v1251 = vpack.c.b16 %v1172, %v1171
  %v1252 = vpack.c.b16 %v1174, %v1173
  %v1253 = vpack.c.b16 %v1176, %v1175
  %v1254 = vpack.c.b16 %v1178, %v1177
  %v1255 = vpack.c.b16 %v1180, %v1179
  %v1256 = vpack.c.b16 %v1182, %v1181
  %v1257 = vpack.c.b16 %v1184, %v1183
  %v1258 = vpack.c.b16 %v1186, %v1185
  %v1259 = vpack.c.b16 %v1188, %v1187
  %v1260 = vpack.c.b16 %v1190, %v1189
  %v1261 = vpack.c.b16 %v1192, %v1191
  %v1262 = vpack.c.b16 %v1194, %v1193
  %v1263 = vpack.c.b16 %v1196, %v1195
  %v1264 = vpack.c.b16 %v1198, %v1197
  %v1265 = vpack.c.b16 %v1200, %v1199
  %v1266 = vpack.c.b16 %v1202, %v1201
  %1331 = vmatprep.subr.bf16.mxu0 0
  %1332 = vmatpush1.bf16.msra.mxu0 %v1203
  %1333 = vmatprep.subr.bf16.mxu0 0
  %1334 = vmatpush1.bf16.msra.mxu0 %v1204
  %1335 = vmatprep.subr.bf16.mxu0 0
  %1336 = vmatpush1.bf16.msra.mxu0 %v1205
  %1337 = vmatprep.subr.bf16.mxu0 0
  %1338 = vmatpush1.bf16.msra.mxu0 %v1206
  %1339 = vmatprep.subr.bf16.mxu0 0
  %1340 = vmatpush1.bf16.msra.mxu0 %v1207
  %1341 = vmatprep.subr.bf16.mxu0 0
  %1342 = vmatpush1.bf16.msra.mxu0 %v1208
  %1343 = vmatprep.subr.bf16.mxu0 0
  %1344 = vmatpush1.bf16.msra.mxu0 %v1209
  %1345 = vmatprep.subr.bf16.mxu0 0
  %1346 = vmatpush1.bf16.msra.mxu0 %v1210
  %1347 = vmatprep.subr.bf16.mxu0 0
  %1348 = vmatpush1.bf16.msra.mxu0 %v1211
  %1349 = vmatprep.subr.bf16.mxu0 0
  %1350 = vmatpush1.bf16.msra.mxu0 %v1212
  %1351 = vmatprep.subr.bf16.mxu0 0
  %1352 = vmatpush1.bf16.msra.mxu0 %v1213
  %1353 = vmatprep.subr.bf16.mxu0 0
  %1354 = vmatpush1.bf16.msra.mxu0 %v1214
  %1355 = vmatprep.subr.bf16.mxu0 0
  %1356 = vmatpush1.bf16.msra.mxu0 %v1215
  %1357 = vmatprep.subr.bf16.mxu0 0
  %1358 = vmatpush1.bf16.msra.mxu0 %v1216
  %1359 = vmatprep.subr.bf16.mxu0 0
  %1360 = vmatpush1.bf16.msra.mxu0 %v1217
  %1361 = vmatprep.subr.bf16.mxu0 0
  %1362 = vmatpush1.bf16.msra.mxu0 %v1218
  %1363 = vmatprep.mubr.bf16.mxu0 %v86
  %1364 = vmatmul.mubr.bf16.gmra.mrb[0].mxu0 %v85
  %v1365 = vpop.f32.mrb[0].mxu0
  %v1366 = vadd.f32 %v942, %v1365
  %v1367 = vpop.f32.mrb[0].mxu0
  %v1368 = vpop.f32.mrb[0].mxu0
  %v1369 = vpop.f32.mrb[0].mxu0
  %1370 = vdwg.mxu0
  %1371 = vmatprep.subr.bf16.mxu0 0
  %1372 = vmatpush1.bf16.msra.mxu0 %v1219
  %1373 = vmatprep.subr.bf16.mxu0 0
  %1374 = vmatpush1.bf16.msra.mxu0 %v1220
  %1375 = vmatprep.subr.bf16.mxu0 0
  %1376 = vmatpush1.bf16.msra.mxu0 %v1221
  %1377 = vmatprep.subr.bf16.mxu0 0
  %1378 = vmatpush1.bf16.msra.mxu0 %v1222
  %1379 = vmatprep.subr.bf16.mxu0 0
  %1380 = vmatpush1.bf16.msra.mxu0 %v1223
  %1381 = vmatprep.subr.bf16.mxu0 0
  %1382 = vmatpush1.bf16.msra.mxu0 %v1224
  %1383 = vmatprep.subr.bf16.mxu0 0
  %1384 = vmatpush1.bf16.msra.mxu0 %v1225
  %1385 = vmatprep.subr.bf16.mxu0 0
  %1386 = vmatpush1.bf16.msra.mxu0 %v1226
  %1387 = vmatprep.subr.bf16.mxu0 0
  %1388 = vmatpush1.bf16.msra.mxu0 %v1227
  %1389 = vmatprep.subr.bf16.mxu0 0
  %1390 = vmatpush1.bf16.msra.mxu0 %v1228
  %1391 = vmatprep.subr.bf16.mxu0 0
  %1392 = vmatpush1.bf16.msra.mxu0 %v1229
  %1393 = vmatprep.subr.bf16.mxu0 0
  %1394 = vmatpush1.bf16.msra.mxu0 %v1230
  %1395 = vmatprep.subr.bf16.mxu0 0
  %1396 = vmatpush1.bf16.msra.mxu0 %v1231
  %1397 = vmatprep.subr.bf16.mxu0 0
  %1398 = vmatpush1.bf16.msra.mxu0 %v1232
  %1399 = vmatprep.subr.bf16.mxu0 0
  %1400 = vmatpush1.bf16.msra.mxu0 %v1233
  %1401 = vmatprep.subr.bf16.mxu0 0
  %1402 = vmatpush1.bf16.msra.mxu0 %v1234
  %1403 = vmatprep.mubr.bf16.mxu0 %v88
  %1404 = vmatmul.mubr.bf16.gmra.mrb[0].mxu0 %v87
  %v1405 = vpop.f32.mrb[0].mxu0
  %v1406 = vadd.f32 %v1366, %v1405
  %v1407 = vpop.f32.mrb[0].mxu0
  %v1408 = vpop.f32.mrb[0].mxu0
  %v1409 = vpop.f32.mrb[0].mxu0
  %1410 = vdwg.mxu0
  %1411 = vmatprep.subr.bf16.mxu0 0
  %1412 = vmatpush1.bf16.msra.mxu0 %v1235
  %1413 = vmatprep.subr.bf16.mxu0 0
  %1414 = vmatpush1.bf16.msra.mxu0 %v1236
  %1415 = vmatprep.subr.bf16.mxu0 0
  %1416 = vmatpush1.bf16.msra.mxu0 %v1237
  %1417 = vmatprep.subr.bf16.mxu0 0
  %1418 = vmatpush1.bf16.msra.mxu0 %v1238
  %1419 = vmatprep.subr.bf16.mxu0 0
  %1420 = vmatpush1.bf16.msra.mxu0 %v1239
  %1421 = vmatprep.subr.bf16.mxu0 0
  %1422 = vmatpush1.bf16.msra.mxu0 %v1240
  %1423 = vmatprep.subr.bf16.mxu0 0
  %1424 = vmatpush1.bf16.msra.mxu0 %v1241
  %1425 = vmatprep.subr.bf16.mxu0 0
  %1426 = vmatpush1.bf16.msra.mxu0 %v1242
  %1427 = vmatprep.subr.bf16.mxu0 0
  %1428 = vmatpush1.bf16.msra.mxu0 %v1243
  %1429 = vmatprep.subr.bf16.mxu0 0
  %1430 = vmatpush1.bf16.msra.mxu0 %v1244
  %1431 = vmatprep.subr.bf16.mxu0 0
  %1432 = vmatpush1.bf16.msra.mxu0 %v1245
  %1433 = vmatprep.subr.bf16.mxu0 0
  %1434 = vmatpush1.bf16.msra.mxu0 %v1246
  %1435 = vmatprep.subr.bf16.mxu0 0
  %1436 = vmatpush1.bf16.msra.mxu0 %v1247
  %1437 = vmatprep.subr.bf16.mxu0 0
  %1438 = vmatpush1.bf16.msra.mxu0 %v1248
  %1439 = vmatprep.subr.bf16.mxu0 0
  %1440 = vmatpush1.bf16.msra.mxu0 %v1249
  %1441 = vmatprep.subr.bf16.mxu0 0
  %1442 = vmatpush1.bf16.msra.mxu0 %v1250
  %1443 = vmatprep.mubr.bf16.mxu0 %v90
  %1444 = vmatmul.mubr.bf16.gmra.mrb[0].mxu0 %v89
  %v1445 = vpop.f32.mrb[0].mxu0
  %v1446 = vadd.f32 %v1406, %v1445
  %v1447 = vpop.f32.mrb[0].mxu0
  %v1448 = vpop.f32.mrb[0].mxu0
  %v1449 = vpop.f32.mrb[0].mxu0
  %1450 = vdwg.mxu0
  %1451 = vmatprep.subr.bf16.mxu0 0
  %1452 = vmatpush1.bf16.msra.mxu0 %v1251
  %1453 = vmatprep.subr.bf16.mxu0 0
  %1454 = vmatpush1.bf16.msra.mxu0 %v1252
  %1455 = vmatprep.subr.bf16.mxu0 0
  %1456 = vmatpush1.bf16.msra.mxu0 %v1253
  %1457 = vmatprep.subr.bf16.mxu0 0
  %1458 = vmatpush1.bf16.msra.mxu0 %v1254
  %1459 = vmatprep.subr.bf16.mxu0 0
  %1460 = vmatpush1.bf16.msra.mxu0 %v1255
  %1461 = vmatprep.subr.bf16.mxu0 0
  %1462 = vmatpush1.bf16.msra.mxu0 %v1256
  %1463 = vmatprep.subr.bf16.mxu0 0
  %1464 = vmatpush1.bf16.msra.mxu0 %v1257
  %1465 = vmatprep.subr.bf16.mxu0 0
  %1466 = vmatpush1.bf16.msra.mxu0 %v1258
  %1467 = vmatprep.subr.bf16.mxu0 0
  %1468 = vmatpush1.bf16.msra.mxu0 %v1259
  %1469 = vmatprep.subr.bf16.mxu0 0
  %1470 = vmatpush1.bf16.msra.mxu0 %v1260
  %1471 = vmatprep.subr.bf16.mxu0 0
  %1472 = vmatpush1.bf16.msra.mxu0 %v1261
  %1473 = vmatprep.subr.bf16.mxu0 0
  %1474 = vmatpush1.bf16.msra.mxu0 %v1262
  %1475 = vmatprep.subr.bf16.mxu0 0
  %1476 = vmatpush1.bf16.msra.mxu0 %v1263
  %1477 = vmatprep.subr.bf16.mxu0 0
  %1478 = vmatpush1.bf16.msra.mxu0 %v1264
  %1479 = vmatprep.subr.bf16.mxu0 0
  %1480 = vmatpush1.bf16.msra.mxu0 %v1265
  %1481 = vmatprep.subr.bf16.mxu0 0
  %1482 = vmatpush1.bf16.msra.mxu0 %v1266
  %1483 = vmatprep.mubr.bf16.mxu0 %v92
  %1484 = vmatmul.mubr.bf16.gmra.mrb[0].mxu0 %v91
  %v1485 = vpop.f32.mrb[0].mxu0
  %v1486 = vadd.f32 %v1446, %v1485
  %v1487 = vpop.f32.mrb[0].mxu0
  %v1488 = vpop.f32.mrb[0].mxu0
  %v1489 = vpop.f32.mrb[0].mxu0
  %1490 = vdwg.mxu0
  %v1491 = vld [vmem:[%s4] sm:$0x1]
  %v1493 = vlaneseq
  %v1494 = vshrl.u32 %v1493, 7
  %v1495 = vsub.s32 0, %v1494
  %v1496 = vrot.slane %v1491, %v1495
  %v1498 = vadd.f32 %v1486, %v1496
  %v1499 = vmax.f32 %v1498, 0.0
  %v1500 = vld [vmem:[%s5] sm:$0xff]
  %v1501 = vld [vmem:[%s5 + $0x8] sm:$0xff]
  %v1502 = vld [vmem:[%s5 + $0x10] sm:$0xff]
  %v1503 = vld [vmem:[%s5 + $0x18] sm:$0xff]
  %v1504 = vld [vmem:[%s5 + $0x20] sm:$0xff]
  %v1505 = vld [vmem:[%s5 + $0x28] sm:$0xff]
  %v1506 = vld [vmem:[%s5 + $0x30] sm:$0xff]
  %v1507 = vld [vmem:[%s5 + $0x38] sm:$0xff]
  %v1508 = vld [vmem:[%s6] sm:$0x1]
  %v1510 = vlaneseq
  %v1511 = vshrl.u32 %v1510, 7
  %v1512 = vsub.s32 0, %v1511
  %v1513 = vrot.slane %v1508, %v1512
  %vm1515 = vcmask 523264
  %v1517 = vsel %vm1515, %v1499, 0
  %1519 = vmatprep.subr.mxu0 0.0
  %1520 = vmatpush1.msra.mxu0 %v1500
  %1521 = vmatprep.subr.mxu0 0.0
  %1522 = vmatpush1.msra.mxu0 %v1501
  %1523 = vmatprep.subr.mxu0 0.0
  %1524 = vmatpush1.msra.mxu0 %v1502
  %1525 = vmatprep.subr.mxu0 0.0
  %1526 = vmatpush1.msra.mxu0 %v1503
  %1527 = vmatprep.subr.mxu0 0.0
  %1528 = vmatpush1.msra.mxu0 %v1504
  %1529 = vmatprep.subr.mxu0 0.0
  %1530 = vmatpush1.msra.mxu0 %v1505
  %1531 = vmatprep.subr.mxu0 0.0
  %1532 = vmatpush1.msra.mxu0 %v1506
  %1533 = vmatprep.subr.mxu0 0.0
  %1534 = vmatpush1.msra.mxu0 %v1507
  %1535 = vmatprep.subr.mxu0 0.0
  %1536 = vmatpush1.msra.mxu0 0.0
  %1537 = vmatprep.subr.mxu0 0.0
  %1538 = vmatpush1.msra.mxu0 0.0
  %1539 = vmatprep.subr.mxu0 0.0
  %1540 = vmatpush1.msra.mxu0 0.0
  %1541 = vmatprep.subr.mxu0 0.0
  %1542 = vmatpush1.msra.mxu0 0.0
  %1543 = vmatprep.subr.mxu0 0.0
  %1544 = vmatpush1.msra.mxu0 0.0
  %1545 = vmatprep.subr.mxu0 0.0
  %1546 = vmatpush1.msra.mxu0 0.0
  %1547 = vmatprep.subr.mxu0 0.0
  %1548 = vmatpush1.msra.mxu0 0.0
  %1549 = vmatprep.subr.mxu0 0.0
  %1550 = vmatpush1.msra.mxu0 0.0
  %1551 = vmatprep.subr.mxu0 0.0
  %1552 = vmatpush1.msra.mxu0 0.0
  %1553 = vmatprep.subr.mxu0 0.0
  %1554 = vmatpush1.msra.mxu0 0.0
  %1555 = vmatprep.subr.mxu0 0.0
  %1556 = vmatpush1.msra.mxu0 0.0
  %1557 = vmatprep.subr.mxu0 0.0
  %1558 = vmatpush1.msra.mxu0 0.0
  %1559 = vmatprep.subr.mxu0 0.0
  %1560 = vmatpush1.msra.mxu0 0.0
  %1561 = vmatprep.subr.mxu0 0.0
  %1562 = vmatpush1.msra.mxu0 0.0
  %1563 = vmatprep.subr.mxu0 0.0
  %1564 = vmatpush1.msra.mxu0 0.0
  %1565 = vmatprep.subr.mxu0 0.0
  %1566 = vmatpush1.msra.mxu0 0.0
  %1567 = vmatprep.subr.mxu0 0.0
  %1568 = vmatpush1.msra.mxu0 0.0
  %1569 = vmatprep.subr.mxu0 0.0
  %1570 = vmatpush1.msra.mxu0 0.0
  %1571 = vmatprep.subr.mxu0 0.0
  %1572 = vmatpush1.msra.mxu0 0.0
  %1573 = vmatprep.subr.mxu0 0.0
  %1574 = vmatpush1.msra.mxu0 0.0
  %1575 = vmatprep.subr.mxu0 0.0
  %1576 = vmatpush1.msra.mxu0 0.0
  %1577 = vmatprep.subr.mxu0 0.0
  %1578 = vmatpush1.msra.mxu0 0.0
  %1579 = vmatprep.subr.mxu0 0.0
  %1580 = vmatpush1.msra.mxu0 0.0
  %1581 = vmatprep.subr.mxu0 0.0
  %1582 = vmatpush1.msra.mxu0 0.0
  %1583 = vmatprep.mubr.f32.mxu0 0.0
  %1584 = vmatmul.mubr.f32.gmra.mrb[0].mxu0 %v1517
  %v1585 = vpop.f32.mrb[0].mxu0
  %v1586 = vadd.f32 %v1513, %v1585
  %v1587 = vpop.f32.mrb[0].mxu0
  %1588 = vdwg.mxu0
  %v1589 = vmax.f32 %v1586, 0.0
  %v1590 = vld [vmem:[%s7] sm:$0xff]
  %v1591 = vld [vmem:[%s7 + $0x8] sm:$0xff]
  %v1592 = vld [vmem:[%s7 + $0x10] sm:$0xff]
  %v1593 = vld [vmem:[%s7 + $0x18] sm:$0xff]
  %v1594 = vld [vmem:[%s8] sm:$0x1]
  %v1596 = vlaneseq
  %v1597 = vshrl.u32 %v1596, 7
  %v1598 = vsub.s32 0, %v1597
  %v1599 = vrot.slane %v1594, %v1598
  %vm1601 = vcmask 261120
  %v1603 = vsel %vm1601, %v1589, 0
  %1605 = vmatprep.subr.mxu0 0.0
  %1606 = vmatpush1.msra.mxu0 %v1590
  %1607 = vmatprep.subr.mxu0 0.0
  %1608 = vmatpush1.msra.mxu0 %v1591
  %1609 = vmatprep.subr.mxu0 0.0
  %1610 = vmatpush1.msra.mxu0 %v1592
  %1611 = vmatprep.subr.mxu0 0.0
  %1612 = vmatpush1.msra.mxu0 %v1593
  %1613 = vmatprep.subr.mxu0 0.0
  %1614 = vmatpush1.msra.mxu0 0.0
  %1615 = vmatprep.subr.mxu0 0.0
  %1616 = vmatpush1.msra.mxu0 0.0
  %1617 = vmatprep.subr.mxu0 0.0
  %1618 = vmatpush1.msra.mxu0 0.0
  %1619 = vmatprep.subr.mxu0 0.0
  %1620 = vmatpush1.msra.mxu0 0.0
  %1621 = vmatprep.subr.mxu0 0.0
  %1622 = vmatpush1.msra.mxu0 0.0
  %1623 = vmatprep.subr.mxu0 0.0
  %1624 = vmatpush1.msra.mxu0 0.0
  %1625 = vmatprep.subr.mxu0 0.0
  %1626 = vmatpush1.msra.mxu0 0.0
  %1627 = vmatprep.subr.mxu0 0.0
  %1628 = vmatpush1.msra.mxu0 0.0
  %1629 = vmatprep.subr.mxu0 0.0
  %1630 = vmatpush1.msra.mxu0 0.0
  %1631 = vmatprep.subr.mxu0 0.0
  %1632 = vmatpush1.msra.mxu0 0.0
  %1633 = vmatprep.subr.mxu0 0.0
  %1634 = vmatpush1.msra.mxu0 0.0
  %1635 = vmatprep.subr.mxu0 0.0
  %1636 = vmatpush1.msra.mxu0 0.0
  %1637 = vmatprep.subr.mxu0 0.0
  %1638 = vmatpush1.msra.mxu0 0.0
  %1639 = vmatprep.subr.mxu0 0.0
  %1640 = vmatpush1.msra.mxu0 0.0
  %1641 = vmatprep.subr.mxu0 0.0
  %1642 = vmatpush1.msra.mxu0 0.0
  %1643 = vmatprep.subr.mxu0 0.0
  %1644 = vmatpush1.msra.mxu0 0.0
  %1645 = vmatprep.subr.mxu0 0.0
  %1646 = vmatpush1.msra.mxu0 0.0
  %1647 = vmatprep.subr.mxu0 0.0
  %1648 = vmatpush1.msra.mxu0 0.0
  %1649 = vmatprep.subr.mxu0 0.0
  %1650 = vmatpush1.msra.mxu0 0.0
  %1651 = vmatprep.subr.mxu0 0.0
  %1652 = vmatpush1.msra.mxu0 0.0
  %1653 = vmatprep.subr.mxu0 0.0
  %1654 = vmatpush1.msra.mxu0 0.0
  %1655 = vmatprep.subr.mxu0 0.0
  %1656 = vmatpush1.msra.mxu0 0.0
  %1657 = vmatprep.subr.mxu0 0.0
  %1658 = vmatpush1.msra.mxu0 0.0
  %1659 = vmatprep.subr.mxu0 0.0
  %1660 = vmatpush1.msra.mxu0 0.0
  %1661 = vmatprep.subr.mxu0 0.0
  %1662 = vmatpush1.msra.mxu0 0.0
  %1663 = vmatprep.subr.mxu0 0.0
  %1664 = vmatpush1.msra.mxu0 0.0
  %1665 = vmatprep.subr.mxu0 0.0
  %1666 = vmatpush1.msra.mxu0 0.0
  %1667 = vmatprep.subr.mxu0 0.0
  %1668 = vmatpush1.msra.mxu0 0.0
  %1669 = vmatprep.mubr.f32.mxu0 0.0
  %1670 = vmatmul.mubr.f32.gmra.mrb[0].mxu0 %v1603
  %v1671 = vpop.f32.mrb[0].mxu0
  %v1672 = vadd.f32 %v1599, %v1671
  %v1673 = vpop.f32.mrb[0].mxu0
  %1674 = vdwg.mxu0
  %v1675 = vmax.f32 %v1672, 0.0
  %v1676 = vld [vmem:[%s9] sm:$0xff]
  %v1677 = vld [vmem:[%s9 + $0x8] sm:$0xff]
  %v1678 = vld [vmem:[%s9 + $0x10] sm:$0xff]
  %v1679 = vld [vmem:[%s9 + $0x18] sm:$0xff]
  %v1680 = vld [vmem:[%s10] sm:$0x1]
  %v1682 = vlaneseq
  %v1683 = vshrl.u32 %v1682, 7
  %v1684 = vsub.s32 0, %v1683
  %v1685 = vrot.slane %v1680, %v1684
  %v1688 = vsel %vm1601, %v1675, 0
  %1690 = vmatprep.subr.mxu0 0.0
  %1691 = vmatpush1.msra.mxu0 %v1676
  %1692 = vmatprep.subr.mxu0 0.0
  %1693 = vmatpush1.msra.mxu0 %v1677
  %1694 = vmatprep.subr.mxu0 0.0
  %1695 = vmatpush1.msra.mxu0 %v1678
  %1696 = vmatprep.subr.mxu0 0.0
  %1697 = vmatpush1.msra.mxu0 %v1679
  %1698 = vmatprep.subr.mxu0 0.0
  %1699 = vmatpush1.msra.mxu0 0.0
  %1700 = vmatprep.subr.mxu0 0.0
  %1701 = vmatpush1.msra.mxu0 0.0
  %1702 = vmatprep.subr.mxu0 0.0
  %1703 = vmatpush1.msra.mxu0 0.0
  %1704 = vmatprep.subr.mxu0 0.0
  %1705 = vmatpush1.msra.mxu0 0.0
  %1706 = vmatprep.subr.mxu0 0.0
  %1707 = vmatpush1.msra.mxu0 0.0
  %1708 = vmatprep.subr.mxu0 0.0
  %1709 = vmatpush1.msra.mxu0 0.0
  %1710 = vmatprep.subr.mxu0 0.0
  %1711 = vmatpush1.msra.mxu0 0.0
  %1712 = vmatprep.subr.mxu0 0.0
  %1713 = vmatpush1.msra.mxu0 0.0
  %1714 = vmatprep.subr.mxu0 0.0
  %1715 = vmatpush1.msra.mxu0 0.0
  %1716 = vmatprep.subr.mxu0 0.0
  %1717 = vmatpush1.msra.mxu0 0.0
  %1718 = vmatprep.subr.mxu0 0.0
  %1719 = vmatpush1.msra.mxu0 0.0
  %1720 = vmatprep.subr.mxu0 0.0
  %1721 = vmatpush1.msra.mxu0 0.0
  %1722 = vmatprep.subr.mxu0 0.0
  %1723 = vmatpush1.msra.mxu0 0.0
  %1724 = vmatprep.subr.mxu0 0.0
  %1725 = vmatpush1.msra.mxu0 0.0
  %1726 = vmatprep.subr.mxu0 0.0
  %1727 = vmatpush1.msra.mxu0 0.0
  %1728 = vmatprep.subr.mxu0 0.0
  %1729 = vmatpush1.msra.mxu0 0.0
  %1730 = vmatprep.subr.mxu0 0.0
  %1731 = vmatpush1.msra.mxu0 0.0
  %1732 = vmatprep.subr.mxu0 0.0
  %1733 = vmatpush1.msra.mxu0 0.0
  %1734 = vmatprep.subr.mxu0 0.0
  %1735 = vmatpush1.msra.mxu0 0.0
  %1736 = vmatprep.subr.mxu0 0.0
  %1737 = vmatpush1.msra.mxu0 0.0
  %1738 = vmatprep.subr.mxu0 0.0
  %1739 = vmatpush1.msra.mxu0 0.0
  %1740 = vmatprep.subr.mxu0 0.0
  %1741 = vmatpush1.msra.mxu0 0.0
  %1742 = vmatprep.subr.mxu0 0.0
  %1743 = vmatpush1.msra.mxu0 0.0
  %1744 = vmatprep.subr.mxu0 0.0
  %1745 = vmatpush1.msra.mxu0 0.0
  %1746 = vmatprep.subr.mxu0 0.0
  %1747 = vmatpush1.msra.mxu0 0.0
  %1748 = vmatprep.subr.mxu0 0.0
  %1749 = vmatpush1.msra.mxu0 0.0
  %1750 = vmatprep.subr.mxu0 0.0
  %1751 = vmatpush1.msra.mxu0 0.0
  %1752 = vmatprep.subr.mxu0 0.0
  %1753 = vmatpush1.msra.mxu0 0.0
  %1754 = vmatprep.mubr.f32.mxu0 0.0
  %1755 = vmatmul.mubr.f32.gmra.mrb[0].mxu0 %v1688
  %v1756 = vpop.f32.mrb[0].mxu0
  %v1757 = vadd.f32 %v1685, %v1756
  %v1758 = vpop.f32.mrb[0].mxu0
  %1759 = vdwg.mxu0
  %v1760 = vlaneseq
  %v1761 = vand.u32 %v1760, 127
  %vm1762 = vcmp.lt.s32.totalorder %v1761, 8
  %v1763 = vsel %vm1762, %v1757, -inf
  %vm1764 = vcmask 91136
  %v1765 = vsel %vm1764, %v1763, -inf
  %1766 = vmax.xlane.f32.xlu0 %v1765
  %v1767 = vpop.xlane.xlu0 %1766
  %v1768 = vsub.f32 %v1757, %v1767
  %v1769 = vsel %vm1762, %v1768, 0.0
  %v1770 = vmul.f32 %v1769, 1.442695
  %v1771 = vpow.pop %v1770
  %v1772 = vsel %vm1762, %v1771, 0.0
  %v1773 = vsel %vm1764, %v1772, 0.0
  %1774 = vadd.xlane.f32.xlu0 %v1773
  %v1775 = vpop.xlane.xlu0 %1774
  %v1776 = vrcp.pop %v1775
  %v1777 = vmul.f32 %v1772, %v1776
  %v1778 = vxor.u32 %v1757, 2147483648
  %v1779 = vmul.f32 %v1778, 1.442695
  %v1780 = vpow.pop %v1779
  %v1781 = vadd.f32 %v1780, 1.0
  %v1782 = vrcp.pop %v1781
  %v1783 = vmul.f32 1.0, %v1782
  %v1784 = vsel %vm1762, %v1777, %v1783
  %1785 = vst.msk [vmem:[%s11] sm:$0x3] %vm1764, %v1784
  // Predicated region
  $region46: #{combined_added_forward.1} parent=0 // pred_check
    _
  $region47: #{combined_added_forward.1} parent=0 // pred_check_branch
    %1787 = sbr.rel (0) target = $region49
  $region48: #{combined_added_forward.1} parent=0 // pred_region
    _
  $region49: #{combined_added_forward.1} parent=0 // pred_fallthru
    _
  // Predicated region
  $region50: #{combined_added_forward.1} parent=0 // pred_check
    _
  $region51: #{combined_added_forward.1} parent=0 // pred_check_branch
    %1789 = sbr.rel (0) target = $region53
  $region52: #{combined_added_forward.1} parent=0 // pred_region
    _
  $region53: #{combined_added_forward.1} parent=0 // pred_fallthru
    _

</llo_original>
